<compile_context>
chip_gen: v6e
topology: v6e:2x2x1
jax: 0.10.0
libtpu: 0.0.40
codegen_flags: <defaults>
</compile_context>

<pallas_src>
import functools

import jax
import jax.numpy as jnp
from jax.experimental import pallas as pl
from jax.experimental.pallas import tpu as pltpu

# ----------------------- small synthetic DeepSeek-V2 config -----------------
HIDDEN = 64
NUM_HEADS = 4
Q_LORA_RANK = 32
KV_LORA_RANK = 32
QK_NOPE_DIM = 16
QK_ROPE_DIM = 8
Q_HEAD_DIM = QK_NOPE_DIM + QK_ROPE_DIM          # 24
V_HEAD_DIM = 16
KV_HEAD_DIM = QK_NOPE_DIM + V_HEAD_DIM          # 32
INTERMEDIATE = 128
RMS_EPS = 1e-6
ROPE_THETA = 10000.0
BATCH = 2
SEQ = 8
ATTN_SCALE = Q_HEAD_DIM ** -0.5
# layer_idx / moe_layer_freq / first_k_dense_replace chosen so this layer is
# the dense-MLP branch of DeepSeekV2DecoderLayer (not MoE).


# ------------------------------ fused kernel ---------------------------------


def _rms(x, w, eps):
    var = jnp.mean(x * x, axis=-1, keepdims=True)
    return x * jax.lax.rsqrt(var + eps) * w


def _rope_deinterleaved(x, cos, sin):
    # x is already de-interleaved (the DeepSeek pair de-interleave is folded
    # into the projection weight columns in the wrapper), so only the standard
    # rotate_half remains.
    half = x.shape[-1] // 2
    rot = jnp.concatenate([-x[:, half:], x[:, :half]], axis=-1)
    return x * cos + rot * sin


def decoder_layer_kernel(
    x_ref, cos_ref, sin_ref, mask_ref,
    in_ln_ref, qa_w_ref, qa_ln_ref, qb_w_ref,
    kva_w_ref, kva_ln_ref, kvb_w_ref, o_w_ref,
    post_ln_ref, gate_w_ref, up_w_ref, down_w_ref,
    out_ref, *, eps, scale):
    f32 = jnp.float32
    x = x_ref[...].astype(f32)            # (S, H)
    cos = cos_ref[...].astype(f32)        # (S, R)
    sin = sin_ref[...].astype(f32)
    mask = mask_ref[0].astype(f32)        # (S, S) additive causal mask

    # ---- input RMSNorm ----
    h_norm = _rms(x, in_ln_ref[...].astype(f32), eps)

    # ---- q path: low-rank down-proj -> RMSNorm -> up-proj (all heads at once)
    q_a = jnp.dot(h_norm, qa_w_ref[...], preferred_element_type=f32)
    q_a = _rms(q_a, qa_ln_ref[...].astype(f32), eps)
    q_full = jnp.dot(q_a, qb_w_ref[...], preferred_element_type=f32)      # (S, NH*QD)

    # ---- kv path: joint compression (+ shared rope part) -> RMSNorm -> up-proj
    ckv = jnp.dot(h_norm, kva_w_ref[...], preferred_element_type=f32)     # (S, KVR+R)
    k_pe = _rope_deinterleaved(ckv[:, KV_LORA_RANK:], cos, sin)           # (S, R)
    c_kv = _rms(ckv[:, :KV_LORA_RANK], kva_ln_ref[...].astype(f32), eps)
    kv_full = jnp.dot(c_kv, kvb_w_ref[...], preferred_element_type=f32)   # (S, NH*KVD)

    # ---- per-head assembly, then a single batched attention over all heads
    q_heads, k_heads, v_heads = [], [], []
    for h in range(NUM_HEADS):
        qo = h * Q_HEAD_DIM
        ko = h * KV_HEAD_DIM
        q_pe = _rope_deinterleaved(
            q_full[:, qo + QK_NOPE_DIM:qo + Q_HEAD_DIM], cos, sin)
        q_heads.append(
            jnp.concatenate([q_full[:, qo:qo + QK_NOPE_DIM], q_pe], axis=-1))
        k_heads.append(
            jnp.concatenate([kv_full[:, ko:ko + QK_NOPE_DIM], k_pe], axis=-1))
        v_heads.append(kv_full[:, ko + QK_NOPE_DIM:ko + KV_HEAD_DIM])
    q_all = jnp.stack(q_heads, axis=0)    # (NH, S, QD)
    k_all = jnp.stack(k_heads, axis=0)    # (NH, S, QD)
    v_all = jnp.stack(v_heads, axis=0)    # (NH, S, VD)

    s = jnp.einsum("hqd,hkd->hqk", q_all, k_all,
                   preferred_element_type=f32) * scale                    # no k.T
    s = s + mask[None, :, :]
    s = s - jnp.max(s, axis=-1, keepdims=True)
    p = jnp.exp(s)
    p = p * pl.reciprocal(jnp.sum(p, axis=-1, keepdims=True), approx=True)
    o_all = jnp.einsum("hqk,hkd->hqd", p, v_all,
                       preferred_element_type=f32)                        # (NH, S, VD)

    attn = jnp.concatenate([o_all[h] for h in range(NUM_HEADS)], axis=-1)  # (S, NH*VD)
    attn_out = jnp.dot(attn, o_w_ref[...], preferred_element_type=f32)     # (S, H)

    hidden = x + attn_out                  # first residual

    # ---- post-attention RMSNorm + fused SwiGLU MLP + second residual ----
    h2 = _rms(hidden, post_ln_ref[...].astype(f32), eps)
    g = jnp.dot(h2, gate_w_ref[...], preferred_element_type=f32)
    u = jnp.dot(h2, up_w_ref[...], preferred_element_type=f32)
    mlp = jnp.dot(g * jax.nn.sigmoid(g) * u, down_w_ref[...],
                  preferred_element_type=f32)

    out_ref[...] = (hidden + mlp).astype(out_ref.dtype)


# --------------------------- wrapper / glue -----------------------------------


def rope_cos_sin(position_ids, dim, theta=ROPE_THETA):
    inv_freq = 1.0 / (theta ** (jnp.arange(0, dim, 2, dtype=jnp.float32) / dim))
    freqs = position_ids.astype(jnp.float32)[..., None] * inv_freq   # (B, S, dim/2)
    emb = jnp.concatenate([freqs, freqs], axis=-1)                   # (B, S, dim)
    return jnp.cos(emb), jnp.sin(emb)


def _fold_rope_permutation(params):
    """Fold the DeepSeek de-interleave permutation into q_b / kv_a rope columns."""
    perm = jnp.concatenate(
        [jnp.arange(0, QK_ROPE_DIM, 2), jnp.arange(1, QK_ROPE_DIM, 2)])
    wqb = params["q_b_w"].reshape(Q_LORA_RANK, NUM_HEADS, Q_HEAD_DIM)
    wqb = jnp.concatenate(
        [wqb[..., :QK_NOPE_DIM], wqb[..., QK_NOPE_DIM:][..., perm]], axis=-1)
    wqb = wqb.reshape(Q_LORA_RANK, NUM_HEADS * Q_HEAD_DIM)
    wkva = params["kv_a_w"]
    wkva = jnp.concatenate(
        [wkva[:, :KV_LORA_RANK], wkva[:, KV_LORA_RANK:][:, perm]], axis=-1)
    return wqb, wkva


def decoder_layer(params, hidden_states, attention_mask, position_ids):
    B, S, H = hidden_states.shape
    x2d = hidden_states.reshape(B * S, H)
    cos, sin = rope_cos_sin(position_ids, QK_ROPE_DIM)           # (B, S, R)
    cos2d = cos.reshape(B * S, QK_ROPE_DIM).astype(x2d.dtype)
    sin2d = sin.reshape(B * S, QK_ROPE_DIM).astype(x2d.dtype)
    mask = attention_mask[:, 0].astype(x2d.dtype)                # (B, S, S)
    qb_w, kva_w = _fold_rope_permutation(params)

    def full(shape):   # weight: constant block index -> stays VMEM-resident
        return pl.BlockSpec(shape, lambda b: (0,) * len(shape))

    def row(last):     # per-batch (S, last) slab of a (B*S, last) activation
        return pl.BlockSpec((S, last), lambda b: (b, 0))

    out2d = pl.pallas_call(
        functools.partial(decoder_layer_kernel, eps=RMS_EPS, scale=ATTN_SCALE),
        grid=(B,),
        in_specs=[
            row(H),                                          # hidden_states
            row(QK_ROPE_DIM),                                # cos
            row(QK_ROPE_DIM),                                # sin
            pl.BlockSpec((1, S, S), lambda b: (b, 0, 0)),    # additive mask
            full((1, HIDDEN)),                               # input_ln_w
            full((HIDDEN, Q_LORA_RANK)),                     # q_a_w
            full((1, Q_LORA_RANK)),                          # q_a_ln_w
            full((Q_LORA_RANK, NUM_HEADS * Q_HEAD_DIM)),     # q_b_w (rope-permuted)
            full((HIDDEN, KV_LORA_RANK + QK_ROPE_DIM)),      # kv_a_w (rope-permuted)
            full((1, KV_LORA_RANK)),                         # kv_a_ln_w
            full((KV_LORA_RANK, NUM_HEADS * KV_HEAD_DIM)),   # kv_b_w
            full((NUM_HEADS * V_HEAD_DIM, HIDDEN)),          # o_w
            full((1, HIDDEN)),                               # post_ln_w
            full((HIDDEN, INTERMEDIATE)),                    # gate_w
            full((HIDDEN, INTERMEDIATE)),                    # up_w
            full((INTERMEDIATE, HIDDEN)),                    # down_w
        ],
        out_specs=row(H),
        out_shape=jax.ShapeDtypeStruct((B * S, H), x2d.dtype),
        compiler_params=pltpu.CompilerParams(
            dimension_semantics=("parallel",)),   # keeps both v7x TCs busy
    )(x2d, cos2d, sin2d, mask,
      params["input_ln_w"], params["q_a_w"], params["q_a_ln_w"], qb_w,
      kva_w, params["kv_a_ln_w"], params["kv_b_w"], params["o_w"],
      params["post_ln_w"], params["gate_w"], params["up_w"], params["down_w"])

    present_key_value = None   # use_cache=False path
    return out2d.reshape(B, S, H), present_key_value


# --------------------------- parameters (synthetic) ---------------------------


def init_params(key):
    def w(k, shape, scale=0.02):
        return scale * jax.random.normal(k, shape, dtype=jnp.float32)

    keys = jax.random.split(key, 8)
    return {
        "input_ln_w": jnp.ones((1, HIDDEN), jnp.float32),
        "post_ln_w": jnp.ones((1, HIDDEN), jnp.float32),
        "q_a_ln_w": jnp.ones((1, Q_LORA_RANK), jnp.float32),
        "kv_a_ln_w": jnp.ones((1, KV_LORA_RANK), jnp.float32),
        # MLA attention projections, stored pre-transposed as (in, out)
        "q_a_w": w(keys[0], (HIDDEN, Q_LORA_RANK)),
        "q_b_w": w(keys[1], (Q_LORA_RANK, NUM_HEADS * Q_HEAD_DIM)),
        "kv_a_w": w(keys[2], (HIDDEN, KV_LORA_RANK + QK_ROPE_DIM)),
        "kv_b_w": w(keys[3], (KV_LORA_RANK, NUM_HEADS * KV_HEAD_DIM)),
        "o_w": w(keys[4], (NUM_HEADS * V_HEAD_DIM, HIDDEN)),
        # dense SwiGLU MLP
        "gate_w": w(keys[5], (HIDDEN, INTERMEDIATE)),
        "up_w": w(keys[6], (HIDDEN, INTERMEDIATE)),
        "down_w": w(keys[7], (INTERMEDIATE, HIDDEN)),
    }


# --------------------- pure-JAX reference (unpermuted weights) ----------------


def apply_rope_ref(x, cos, sin):
    b, h, s, d = x.shape
    x = x.reshape(b, h, s, d // 2, 2).transpose(0, 1, 2, 4, 3).reshape(b, h, s, d)
    cos = cos[:, None]
    sin = sin[:, None]
    x1, x2 = jnp.split(x, 2, axis=-1)
    rot = jnp.concatenate([-x2, x1], axis=-1)
    return x * cos + rot * sin


def reference_decoder_layer(params, hidden_states, attention_mask, position_ids):
    B, S, H = hidden_states.shape

    def rms(x, w):
        var = jnp.mean(x * x, axis=-1, keepdims=True)
        return x * jax.lax.rsqrt(var + RMS_EPS) * w

    x2d = hidden_states.reshape(B * S, H)
    hs_norm = rms(x2d, params["input_ln_w"])
    q_a = rms(hs_norm @ params["q_a_w"], params["q_a_ln_w"])
    q = (q_a @ params["q_b_w"]).reshape(B, S, NUM_HEADS, Q_HEAD_DIM).transpose(0, 2, 1, 3)
    q_nope, q_pe = q[..., :QK_NOPE_DIM], q[..., QK_NOPE_DIM:]
    ckv = hs_norm @ params["kv_a_w"]
    compressed_kv, k_pe = ckv[:, :KV_LORA_RANK], ckv[:, KV_LORA_RANK:]
    k_pe = k_pe.reshape(B, S, 1, QK_ROPE_DIM).transpose(0, 2, 1, 3)
    kv = (rms(compressed_kv, params["kv_a_ln_w"]) @ params["kv_b_w"]).reshape(
        B, S, NUM_HEADS, KV_HEAD_DIM).transpose(0, 2, 1, 3)
    k_nope, v = kv[..., :QK_NOPE_DIM], kv[..., QK_NOPE_DIM:]
    cos, sin = rope_cos_sin(position_ids, QK_ROPE_DIM)
    q_pe = apply_rope_ref(q_pe, cos, sin)
    k_pe = apply_rope_ref(k_pe, cos, sin)
    query = jnp.concatenate([q_nope, q_pe], axis=-1)
    key = jnp.concatenate(
        [k_nope, jnp.broadcast_to(k_pe, (B, NUM_HEADS, S, QK_ROPE_DIM))], axis=-1)
    scores = jnp.einsum("bhqd,bhkd->bhqk", query, key) * ATTN_SCALE + attention_mask
    probs = jax.nn.softmax(scores, axis=-1)
    attn = jnp.einsum("bhqk,bhkd->bhqd", probs, v)
    attn = attn.transpose(0, 2, 1, 3).reshape(B * S, NUM_HEADS * V_HEAD_DIM)
    hidden = x2d + attn @ params["o_w"]
    h2 = rms(hidden, params["post_ln_w"])
    g = h2 @ params["gate_w"]
    u = h2 @ params["up_w"]
    mlp = (g * jax.nn.sigmoid(g) * u) @ params["down_w"]
    return (hidden + mlp).reshape(B, S, H)


# ----------------------------------- main -------------------------------------

if __name__ == "__main__":
    root = jax.random.PRNGKey(0)
    pkey, xkey = jax.random.split(root)
    params = init_params(pkey)

    hidden_states = jax.random.normal(xkey, (BATCH, SEQ, HIDDEN), dtype=jnp.float32)
    position_ids = jnp.broadcast_to(
        jnp.arange(SEQ, dtype=jnp.int32)[None, :], (BATCH, SEQ))
    causal = jnp.tril(jnp.ones((SEQ, SEQ), dtype=bool))
    attention_mask = jnp.where(causal, 0.0, -1e9).astype(jnp.float32)[None, None]
    attention_mask = jnp.broadcast_to(attention_mask, (BATCH, 1, SEQ, SEQ))

    fwd = jax.jit(functools.partial(decoder_layer, params))
    out, present = fwd(hidden_states, attention_mask, position_ids)
    out = jax.block_until_ready(out)

    ref = reference_decoder_layer(params, hidden_states, attention_mask, position_ids)

    assert out.shape == (BATCH, SEQ, HIDDEN), out.shape
    assert bool(jnp.all(jnp.isfinite(out)))
    assert bool(jnp.allclose(out, ref, atol=2e-2, rtol=2e-2)), float(
        jnp.max(jnp.abs(out - ref)))
    print("KERNEL_OK")
</pallas_src>

<mosaic_0001>
module attributes {stable_mosaic.version = 11 : i64} {
  func.func @decoder_layer_kernel(%arg0: i32, %arg1: memref<8x64xf32, #tpu.memory_space<vmem>>, %arg2: memref<8x8xf32, #tpu.memory_space<vmem>>, %arg3: memref<8x8xf32, #tpu.memory_space<vmem>>, %arg4: memref<1x8x8xf32, #tpu.memory_space<vmem>>, %arg5: memref<1x64xf32, #tpu.memory_space<vmem>>, %arg6: memref<64x32xf32, #tpu.memory_space<vmem>>, %arg7: memref<1x32xf32, #tpu.memory_space<vmem>>, %arg8: memref<32x96xf32, #tpu.memory_space<vmem>>, %arg9: memref<64x40xf32, #tpu.memory_space<vmem>>, %arg10: memref<1x32xf32, #tpu.memory_space<vmem>>, %arg11: memref<32x128xf32, #tpu.memory_space<vmem>>, %arg12: memref<64x64xf32, #tpu.memory_space<vmem>>, %arg13: memref<1x64xf32, #tpu.memory_space<vmem>>, %arg14: memref<64x128xf32, #tpu.memory_space<vmem>>, %arg15: memref<64x128xf32, #tpu.memory_space<vmem>>, %arg16: memref<128x64xf32, #tpu.memory_space<vmem>>, %arg17: memref<8x64xf32, #tpu.memory_space<vmem>>) attributes {dimension_semantics = [#tpu.dimension_semantics<parallel>], iteration_bounds = array<i64: 2>, scalar_prefetch = 0 : i64, scratch_operands = 0 : i64, tpu.core_type = #tpu.core_type<tc>, window_params = [{transform_indices = @transform_0, window_bounds = array<i64: 8, 64>}, {transform_indices = @transform_1, window_bounds = array<i64: 8, 8>}, {transform_indices = @transform_2, window_bounds = array<i64: 8, 8>}, {transform_indices = @transform_3, window_bounds = array<i64: 1, 8, 8>}, {pipeline_mode = #tpu.pipeline_mode<synchronous>, transform_indices = @transform_4, window_bounds = array<i64: 1, 64>}, {pipeline_mode = #tpu.pipeline_mode<synchronous>, transform_indices = @transform_5, window_bounds = array<i64: 64, 32>}, {pipeline_mode = #tpu.pipeline_mode<synchronous>, transform_indices = @transform_6, window_bounds = array<i64: 1, 32>}, {pipeline_mode = #tpu.pipeline_mode<synchronous>, transform_indices = @transform_7, window_bounds = array<i64: 32, 96>}, {pipeline_mode = #tpu.pipeline_mode<synchronous>, transform_indices = @transform_8, window_bounds = array<i64: 64, 40>}, {pipeline_mode = #tpu.pipeline_mode<synchronous>, transform_indices = @transform_9, window_bounds = array<i64: 1, 32>}, {pipeline_mode = #tpu.pipeline_mode<synchronous>, transform_indices = @transform_10, window_bounds = array<i64: 32, 128>}, {pipeline_mode = #tpu.pipeline_mode<synchronous>, transform_indices = @transform_11, window_bounds = array<i64: 64, 64>}, {pipeline_mode = #tpu.pipeline_mode<synchronous>, transform_indices = @transform_12, window_bounds = array<i64: 1, 64>}, {pipeline_mode = #tpu.pipeline_mode<synchronous>, transform_indices = @transform_13, window_bounds = array<i64: 64, 128>}, {pipeline_mode = #tpu.pipeline_mode<synchronous>, transform_indices = @transform_14, window_bounds = array<i64: 64, 128>}, {pipeline_mode = #tpu.pipeline_mode<synchronous>, transform_indices = @transform_15, window_bounds = array<i64: 128, 64>}, {transform_indices = @transform_16, window_bounds = array<i64: 8, 64>}]} {
    %c0 = arith.constant 0 : index
    %c0_0 = arith.constant 0 : index
    %0 = vector.load %arg1[%c0, %c0_0] : memref<8x64xf32, #tpu.memory_space<vmem>>, vector<8x64xf32>
    %c0_1 = arith.constant 0 : index
    %c0_2 = arith.constant 0 : index
    %1 = vector.load %arg2[%c0_1, %c0_2] : memref<8x8xf32, #tpu.memory_space<vmem>>, vector<8x8xf32>
    %c0_3 = arith.constant 0 : index
    %c0_4 = arith.constant 0 : index
    %2 = vector.load %arg3[%c0_3, %c0_4] : memref<8x8xf32, #tpu.memory_space<vmem>>, vector<8x8xf32>
    %c0_5 = arith.constant 0 : index
    %c0_6 = arith.constant 0 : index
    %c0_7 = arith.constant 0 : index
    %3 = vector.load %arg4[%c0_5, %c0_6, %c0_7] : memref<1x8x8xf32, #tpu.memory_space<vmem>>, vector<1x8x8xf32>
    %4 = vector.shape_cast %3 : vector<1x8x8xf32> to vector<8x8xf32>
    %c0_8 = arith.constant 0 : index
    %c0_9 = arith.constant 0 : index
    %5 = vector.load %arg5[%c0_8, %c0_9] : memref<1x64xf32, #tpu.memory_space<vmem>>, vector<1x64xf32>
    %6 = arith.mulf %0, %0 : vector<8x64xf32>
    %cst = arith.constant dense<0.000000e+00> : vector<8xf32>
    %7 = vector.multi_reduction <add>, %6, %cst [1] : vector<8x64xf32> to vector<8xf32>
    %8 = vector.shape_cast %7 : vector<8xf32> to vector<8x1xf32>
    %cst_10 = arith.constant 6.400000e+01 : f32
    %9 = vector.broadcast %cst_10 : f32 to vector<8x1xf32>
    %10 = arith.divf %8, %9 : vector<8x1xf32>
    %cst_11 = arith.constant 9.99999997E-7 : f32
    %11 = vector.broadcast %cst_11 : f32 to vector<8x1xf32>
    %12 = arith.addf %10, %11 : vector<8x1xf32>
    %13 = math.rsqrt %12 : vector<8x1xf32>
    %14 = vector.broadcast %13 : vector<8x1xf32> to vector<8x64xf32>
    %15 = arith.mulf %0, %14 : vector<8x64xf32>
    %16 = vector.broadcast %5 : vector<1x64xf32> to vector<8x64xf32>
    %17 = arith.mulf %15, %16 : vector<8x64xf32>
    %c0_12 = arith.constant 0 : index
    %c0_13 = arith.constant 0 : index
    %18 = vector.load %arg6[%c0_12, %c0_13] : memref<64x32xf32, #tpu.memory_space<vmem>>, vector<64x32xf32>
    %cst_14 = arith.constant dense<0.000000e+00> : vector<8x32xf32>
    %19 = tpu.matmul %17, %18, %cst_14 {dimension_numbers = #tpu.dot_dimension_numbers<[1], [0], [0], [1], [0, 0, 1, 1], [], []>} : vector<8x64xf32>, vector<64x32xf32>, vector<8x32xf32> -> vector<8x32xf32>
    %c0_15 = arith.constant 0 : index
    %c0_16 = arith.constant 0 : index
    %20 = vector.load %arg7[%c0_15, %c0_16] : memref<1x32xf32, #tpu.memory_space<vmem>>, vector<1x32xf32>
    %21 = arith.mulf %19, %19 : vector<8x32xf32>
    %cst_17 = arith.constant dense<0.000000e+00> : vector<8xf32>
    %22 = vector.multi_reduction <add>, %21, %cst_17 [1] : vector<8x32xf32> to vector<8xf32>
    %23 = vector.shape_cast %22 : vector<8xf32> to vector<8x1xf32>
    %cst_18 = arith.constant 3.200000e+01 : f32
    %24 = vector.broadcast %cst_18 : f32 to vector<8x1xf32>
    %25 = arith.divf %23, %24 : vector<8x1xf32>
    %cst_19 = arith.constant 9.99999997E-7 : f32
    %26 = vector.broadcast %cst_19 : f32 to vector<8x1xf32>
    %27 = arith.addf %25, %26 : vector<8x1xf32>
    %28 = math.rsqrt %27 : vector<8x1xf32>
    %29 = vector.broadcast %28 : vector<8x1xf32> to vector<8x32xf32>
    %30 = arith.mulf %19, %29 : vector<8x32xf32>
    %31 = vector.broadcast %20 : vector<1x32xf32> to vector<8x32xf32>
    %32 = arith.mulf %30, %31 : vector<8x32xf32>
    %c0_20 = arith.constant 0 : index
    %c0_21 = arith.constant 0 : index
    %33 = vector.load %arg8[%c0_20, %c0_21] : memref<32x96xf32, #tpu.memory_space<vmem>>, vector<32x96xf32>
    %cst_22 = arith.constant dense<0.000000e+00> : vector<8x96xf32>
    %34 = tpu.matmul %32, %33, %cst_22 {dimension_numbers = #tpu.dot_dimension_numbers<[1], [0], [0], [1], [0, 0, 1, 1], [], []>} : vector<8x32xf32>, vector<32x96xf32>, vector<8x96xf32> -> vector<8x96xf32>
    %c0_23 = arith.constant 0 : index
    %c0_24 = arith.constant 0 : index
    %35 = vector.load %arg9[%c0_23, %c0_24] : memref<64x40xf32, #tpu.memory_space<vmem>>, vector<64x40xf32>
    %cst_25 = arith.constant dense<0.000000e+00> : vector<8x40xf32>
    %36 = tpu.matmul %17, %35, %cst_25 {dimension_numbers = #tpu.dot_dimension_numbers<[1], [0], [0], [1], [0, 0, 1, 1], [], []>} : vector<8x64xf32>, vector<64x40xf32>, vector<8x40xf32> -> vector<8x40xf32>
    %37 = vector.extract_strided_slice %36 {offsets = [0, 32], sizes = [8, 8], strides = [1, 1]} : vector<8x40xf32> to vector<8x8xf32>
    %38 = vector.extract_strided_slice %37 {offsets = [0, 4], sizes = [8, 4], strides = [1, 1]} : vector<8x8xf32> to vector<8x4xf32>
    %cst_26 = arith.constant 0.000000e+00 : f32
    %39 = vector.broadcast %cst_26 : f32 to vector<8x4xf32>
    %40 = arith.subf %39, %38 : vector<8x4xf32>
    %41 = vector.extract_strided_slice %37 {offsets = [0, 0], sizes = [8, 4], strides = [1, 1]} : vector<8x8xf32> to vector<8x4xf32>
    %42 = tpu.concatenate %40, %41 in 1 : vector<8x4xf32>, vector<8x4xf32> -> vector<8x8xf32>
    %43 = arith.mulf %37, %1 : vector<8x8xf32>
    %44 = arith.mulf %42, %2 : vector<8x8xf32>
    %45 = arith.addf %43, %44 : vector<8x8xf32>
    %46 = vector.extract_strided_slice %36 {offsets = [0, 0], sizes = [8, 32], strides = [1, 1]} : vector<8x40xf32> to vector<8x32xf32>
    %c0_27 = arith.constant 0 : index
    %c0_28 = arith.constant 0 : index
    %47 = vector.load %arg10[%c0_27, %c0_28] : memref<1x32xf32, #tpu.memory_space<vmem>>, vector<1x32xf32>
    %48 = arith.mulf %46, %46 : vector<8x32xf32>
    %cst_29 = arith.constant dense<0.000000e+00> : vector<8xf32>
    %49 = vector.multi_reduction <add>, %48, %cst_29 [1] : vector<8x32xf32> to vector<8xf32>
    %50 = vector.shape_cast %49 : vector<8xf32> to vector<8x1xf32>
    %cst_30 = arith.constant 3.200000e+01 : f32
    %51 = vector.broadcast %cst_30 : f32 to vector<8x1xf32>
    %52 = arith.divf %50, %51 : vector<8x1xf32>
    %cst_31 = arith.constant 9.99999997E-7 : f32
    %53 = vector.broadcast %cst_31 : f32 to vector<8x1xf32>
    %54 = arith.addf %52, %53 : vector<8x1xf32>
    %55 = math.rsqrt %54 : vector<8x1xf32>
    %56 = vector.broadcast %55 : vector<8x1xf32> to vector<8x32xf32>
    %57 = arith.mulf %46, %56 : vector<8x32xf32>
    %58 = vector.broadcast %47 : vector<1x32xf32> to vector<8x32xf32>
    %59 = arith.mulf %57, %58 : vector<8x32xf32>
    %c0_32 = arith.constant 0 : index
    %c0_33 = arith.constant 0 : index
    %60 = vector.load %arg11[%c0_32, %c0_33] : memref<32x128xf32, #tpu.memory_space<vmem>>, vector<32x128xf32>
    %cst_34 = arith.constant dense<0.000000e+00> : vector<8x128xf32>
    %61 = tpu.matmul %59, %60, %cst_34 {dimension_numbers = #tpu.dot_dimension_numbers<[1], [0], [0], [1], [0, 0, 1, 1], [], []>} : vector<8x32xf32>, vector<32x128xf32>, vector<8x128xf32> -> vector<8x128xf32>
    %62 = vector.extract_strided_slice %34 {offsets = [0, 16], sizes = [8, 8], strides = [1, 1]} : vector<8x96xf32> to vector<8x8xf32>
    %63 = vector.extract_strided_slice %62 {offsets = [0, 4], sizes = [8, 4], strides = [1, 1]} : vector<8x8xf32> to vector<8x4xf32>
    %cst_35 = arith.constant 0.000000e+00 : f32
    %64 = vector.broadcast %cst_35 : f32 to vector<8x4xf32>
    %65 = arith.subf %64, %63 : vector<8x4xf32>
    %66 = vector.extract_strided_slice %62 {offsets = [0, 0], sizes = [8, 4], strides = [1, 1]} : vector<8x8xf32> to vector<8x4xf32>
    %67 = tpu.concatenate %65, %66 in 1 : vector<8x4xf32>, vector<8x4xf32> -> vector<8x8xf32>
    %68 = arith.mulf %62, %1 : vector<8x8xf32>
    %69 = arith.mulf %67, %2 : vector<8x8xf32>
    %70 = arith.addf %68, %69 : vector<8x8xf32>
    %71 = vector.extract_strided_slice %34 {offsets = [0, 0], sizes = [8, 16], strides = [1, 1]} : vector<8x96xf32> to vector<8x16xf32>
    %72 = tpu.concatenate %71, %70 in 1 : vector<8x16xf32>, vector<8x8xf32> -> vector<8x24xf32>
    %73 = vector.extract_strided_slice %61 {offsets = [0, 0], sizes = [8, 16], strides = [1, 1]} : vector<8x128xf32> to vector<8x16xf32>
    %74 = tpu.concatenate %73, %45 in 1 : vector<8x16xf32>, vector<8x8xf32> -> vector<8x24xf32>
    %75 = vector.extract_strided_slice %61 {offsets = [0, 16], sizes = [8, 16], strides = [1, 1]} : vector<8x128xf32> to vector<8x16xf32>
    %76 = vector.extract_strided_slice %34 {offsets = [0, 40], sizes = [8, 8], strides = [1, 1]} : vector<8x96xf32> to vector<8x8xf32>
    %77 = vector.extract_strided_slice %76 {offsets = [0, 4], sizes = [8, 4], strides = [1, 1]} : vector<8x8xf32> to vector<8x4xf32>
    %cst_36 = arith.constant 0.000000e+00 : f32
    %78 = vector.broadcast %cst_36 : f32 to vector<8x4xf32>
    %79 = arith.subf %78, %77 : vector<8x4xf32>
    %80 = vector.extract_strided_slice %76 {offsets = [0, 0], sizes = [8, 4], strides = [1, 1]} : vector<8x8xf32> to vector<8x4xf32>
    %81 = tpu.concatenate %79, %80 in 1 : vector<8x4xf32>, vector<8x4xf32> -> vector<8x8xf32>
    %82 = arith.mulf %76, %1 : vector<8x8xf32>
    %83 = arith.mulf %81, %2 : vector<8x8xf32>
    %84 = arith.addf %82, %83 : vector<8x8xf32>
    %85 = vector.extract_strided_slice %34 {offsets = [0, 24], sizes = [8, 16], strides = [1, 1]} : vector<8x96xf32> to vector<8x16xf32>
    %86 = tpu.concatenate %85, %84 in 1 : vector<8x16xf32>, vector<8x8xf32> -> vector<8x24xf32>
    %87 = vector.extract_strided_slice %61 {offsets = [0, 32], sizes = [8, 16], strides = [1, 1]} : vector<8x128xf32> to vector<8x16xf32>
    %88 = tpu.concatenate %87, %45 in 1 : vector<8x16xf32>, vector<8x8xf32> -> vector<8x24xf32>
    %89 = vector.extract_strided_slice %61 {offsets = [0, 48], sizes = [8, 16], strides = [1, 1]} : vector<8x128xf32> to vector<8x16xf32>
    %90 = vector.extract_strided_slice %34 {offsets = [0, 64], sizes = [8, 8], strides = [1, 1]} : vector<8x96xf32> to vector<8x8xf32>
    %91 = vector.extract_strided_slice %90 {offsets = [0, 4], sizes = [8, 4], strides = [1, 1]} : vector<8x8xf32> to vector<8x4xf32>
    %cst_37 = arith.constant 0.000000e+00 : f32
    %92 = vector.broadcast %cst_37 : f32 to vector<8x4xf32>
    %93 = arith.subf %92, %91 : vector<8x4xf32>
    %94 = vector.extract_strided_slice %90 {offsets = [0, 0], sizes = [8, 4], strides = [1, 1]} : vector<8x8xf32> to vector<8x4xf32>
    %95 = tpu.concatenate %93, %94 in 1 : vector<8x4xf32>, vector<8x4xf32> -> vector<8x8xf32>
    %96 = arith.mulf %90, %1 : vector<8x8xf32>
    %97 = arith.mulf %95, %2 : vector<8x8xf32>
    %98 = arith.addf %96, %97 : vector<8x8xf32>
    %99 = vector.extract_strided_slice %34 {offsets = [0, 48], sizes = [8, 16], strides = [1, 1]} : vector<8x96xf32> to vector<8x16xf32>
    %100 = tpu.concatenate %99, %98 in 1 : vector<8x16xf32>, vector<8x8xf32> -> vector<8x24xf32>
    %101 = vector.extract_strided_slice %61 {offsets = [0, 64], sizes = [8, 16], strides = [1, 1]} : vector<8x128xf32> to vector<8x16xf32>
    %102 = tpu.concatenate %101, %45 in 1 : vector<8x16xf32>, vector<8x8xf32> -> vector<8x24xf32>
    %103 = vector.extract_strided_slice %61 {offsets = [0, 80], sizes = [8, 16], strides = [1, 1]} : vector<8x128xf32> to vector<8x16xf32>
    %104 = vector.extract_strided_slice %34 {offsets = [0, 88], sizes = [8, 8], strides = [1, 1]} : vector<8x96xf32> to vector<8x8xf32>
    %105 = vector.extract_strided_slice %104 {offsets = [0, 4], sizes = [8, 4], strides = [1, 1]} : vector<8x8xf32> to vector<8x4xf32>
    %cst_38 = arith.constant 0.000000e+00 : f32
    %106 = vector.broadcast %cst_38 : f32 to vector<8x4xf32>
    %107 = arith.subf %106, %105 : vector<8x4xf32>
    %108 = vector.extract_strided_slice %104 {offsets = [0, 0], sizes = [8, 4], strides = [1, 1]} : vector<8x8xf32> to vector<8x4xf32>
    %109 = tpu.concatenate %107, %108 in 1 : vector<8x4xf32>, vector<8x4xf32> -> vector<8x8xf32>
    %110 = arith.mulf %104, %1 : vector<8x8xf32>
    %111 = arith.mulf %109, %2 : vector<8x8xf32>
    %112 = arith.addf %110, %111 : vector<8x8xf32>
    %113 = vector.extract_strided_slice %34 {offsets = [0, 72], sizes = [8, 16], strides = [1, 1]} : vector<8x96xf32> to vector<8x16xf32>
    %114 = tpu.concatenate %113, %112 in 1 : vector<8x16xf32>, vector<8x8xf32> -> vector<8x24xf32>
    %115 = vector.extract_strided_slice %61 {offsets = [0, 96], sizes = [8, 16], strides = [1, 1]} : vector<8x128xf32> to vector<8x16xf32>
    %116 = tpu.concatenate %115, %45 in 1 : vector<8x16xf32>, vector<8x8xf32> -> vector<8x24xf32>
    %117 = vector.extract_strided_slice %61 {offsets = [0, 112], sizes = [8, 16], strides = [1, 1]} : vector<8x128xf32> to vector<8x16xf32>
    %118 = vector.shape_cast %72 : vector<8x24xf32> to vector<1x8x24xf32>
    %119 = vector.shape_cast %86 : vector<8x24xf32> to vector<1x8x24xf32>
    %120 = vector.shape_cast %100 : vector<8x24xf32> to vector<1x8x24xf32>
    %121 = vector.shape_cast %114 : vector<8x24xf32> to vector<1x8x24xf32>
    %122 = tpu.concatenate %118, %119, %120, %121 in 0 : vector<1x8x24xf32>, vector<1x8x24xf32>, vector<1x8x24xf32>, vector<1x8x24xf32> -> vector<4x8x24xf32>
    %123 = vector.shape_cast %74 : vector<8x24xf32> to vector<1x8x24xf32>
    %124 = vector.shape_cast %88 : vector<8x24xf32> to vector<1x8x24xf32>
    %125 = vector.shape_cast %102 : vector<8x24xf32> to vector<1x8x24xf32>
    %126 = vector.shape_cast %116 : vector<8x24xf32> to vector<1x8x24xf32>
    %127 = tpu.concatenate %123, %124, %125, %126 in 0 : vector<1x8x24xf32>, vector<1x8x24xf32>, vector<1x8x24xf32>, vector<1x8x24xf32> -> vector<4x8x24xf32>
    %128 = vector.shape_cast %75 : vector<8x16xf32> to vector<1x8x16xf32>
    %129 = vector.shape_cast %89 : vector<8x16xf32> to vector<1x8x16xf32>
    %130 = vector.shape_cast %103 : vector<8x16xf32> to vector<1x8x16xf32>
    %131 = vector.shape_cast %117 : vector<8x16xf32> to vector<1x8x16xf32>
    %132 = tpu.concatenate %128, %129, %130, %131 in 0 : vector<1x8x16xf32>, vector<1x8x16xf32>, vector<1x8x16xf32>, vector<1x8x16xf32> -> vector<4x8x16xf32>
    "tpu.trace_start"() <{level = 10 : i32, message = "hqd,hkd->hqk"}> : () -> ()
    %cst_39 = arith.constant dense<0.000000e+00> : vector<4x8x8xf32>
    %133 = tpu.matmul %122, %127, %cst_39 {dimension_numbers = #tpu.dot_dimension_numbers<[2], [2], [1], [1], [0, 0, 0, 1, 1, 1], [0], [0]>} : vector<4x8x24xf32>, vector<4x8x24xf32>, vector<4x8x8xf32> -> vector<4x8x8xf32>
    "tpu.trace_stop"() : () -> ()
    %cst_40 = arith.constant 0.204124153 : f32
    %134 = vector.broadcast %cst_40 : f32 to vector<4x8x8xf32>
    %135 = arith.mulf %133, %134 : vector<4x8x8xf32>
    %136 = vector.shape_cast %4 : vector<8x8xf32> to vector<1x8x8xf32>
    %137 = vector.broadcast %136 : vector<1x8x8xf32> to vector<4x8x8xf32>
    %138 = arith.addf %135, %137 : vector<4x8x8xf32>
    %cst_41 = arith.constant dense<0xFF800000> : vector<4x8xf32>
    %139 = vector.multi_reduction <maximumf>, %138, %cst_41 [2] : vector<4x8x8xf32> to vector<4x8xf32>
    %140 = vector.shape_cast %139 : vector<4x8xf32> to vector<4x8x1xf32>
    %141 = vector.broadcast %140 : vector<4x8x1xf32> to vector<4x8x8xf32>
    %142 = arith.subf %138, %141 : vector<4x8x8xf32>
    %143 = math.exp %142 : vector<4x8x8xf32>
    %cst_42 = arith.constant dense<0.000000e+00> : vector<4x8xf32>
    %144 = vector.multi_reduction <add>, %143, %cst_42 [2] : vector<4x8x8xf32> to vector<4x8xf32>
    %145 = vector.shape_cast %144 : vector<4x8xf32> to vector<4x8x1xf32>
    %146 = tpu.reciprocal %145 {approx = true} : vector<4x8x1xf32> -> vector<4x8x1xf32>
    %147 = vector.broadcast %146 : vector<4x8x1xf32> to vector<4x8x8xf32>
    %148 = arith.mulf %143, %147 : vector<4x8x8xf32>
    "tpu.trace_start"() <{level = 10 : i32, message = "hqk,hkd->hqd"}> : () -> ()
    %cst_43 = arith.constant dense<0.000000e+00> : vector<4x8x16xf32>
    %149 = tpu.matmul %148, %132, %cst_43 {dimension_numbers = #tpu.dot_dimension_numbers<[2], [1], [1], [2], [0, 0, 0, 1, 1, 2], [0], [0]>} : vector<4x8x8xf32>, vector<4x8x16xf32>, vector<4x8x16xf32> -> vector<4x8x16xf32>
    "tpu.trace_stop"() : () -> ()
    %150 = vector.extract_strided_slice %149 {offsets = [0, 0, 0], sizes = [1, 8, 16], strides = [1, 1, 1]} : vector<4x8x16xf32> to vector<1x8x16xf32>
    %151 = vector.shape_cast %150 : vector<1x8x16xf32> to vector<8x16xf32>
    %152 = vector.extract_strided_slice %149 {offsets = [1, 0, 0], sizes = [1, 8, 16], strides = [1, 1, 1]} : vector<4x8x16xf32> to vector<1x8x16xf32>
    %153 = vector.shape_cast %152 : vector<1x8x16xf32> to vector<8x16xf32>
    %154 = vector.extract_strided_slice %149 {offsets = [2, 0, 0], sizes = [1, 8, 16], strides = [1, 1, 1]} : vector<4x8x16xf32> to vector<1x8x16xf32>
    %155 = vector.shape_cast %154 : vector<1x8x16xf32> to vector<8x16xf32>
    %156 = vector.extract_strided_slice %149 {offsets = [3, 0, 0], sizes = [1, 8, 16], strides = [1, 1, 1]} : vector<4x8x16xf32> to vector<1x8x16xf32>
    %157 = vector.shape_cast %156 : vector<1x8x16xf32> to vector<8x16xf32>
    %158 = tpu.concatenate %151, %153, %155, %157 in 1 : vector<8x16xf32>, vector<8x16xf32>, vector<8x16xf32>, vector<8x16xf32> -> vector<8x64xf32>
    %c0_44 = arith.constant 0 : index
    %c0_45 = arith.constant 0 : index
    %159 = vector.load %arg12[%c0_44, %c0_45] : memref<64x64xf32, #tpu.memory_space<vmem>>, vector<64x64xf32>
    %cst_46 = arith.constant dense<0.000000e+00> : vector<8x64xf32>
    %160 = tpu.matmul %158, %159, %cst_46 {dimension_numbers = #tpu.dot_dimension_numbers<[1], [0], [0], [1], [0, 0, 1, 1], [], []>} : vector<8x64xf32>, vector<64x64xf32>, vector<8x64xf32> -> vector<8x64xf32>
    %161 = arith.addf %0, %160 : vector<8x64xf32>
    %c0_47 = arith.constant 0 : index
    %c0_48 = arith.constant 0 : index
    %162 = vector.load %arg13[%c0_47, %c0_48] : memref<1x64xf32, #tpu.memory_space<vmem>>, vector<1x64xf32>
    %163 = arith.mulf %161, %161 : vector<8x64xf32>
    %cst_49 = arith.constant dense<0.000000e+00> : vector<8xf32>
    %164 = vector.multi_reduction <add>, %163, %cst_49 [1] : vector<8x64xf32> to vector<8xf32>
    %165 = vector.shape_cast %164 : vector<8xf32> to vector<8x1xf32>
    %cst_50 = arith.constant 6.400000e+01 : f32
    %166 = vector.broadcast %cst_50 : f32 to vector<8x1xf32>
    %167 = arith.divf %165, %166 : vector<8x1xf32>
    %cst_51 = arith.constant 9.99999997E-7 : f32
    %168 = vector.broadcast %cst_51 : f32 to vector<8x1xf32>
    %169 = arith.addf %167, %168 : vector<8x1xf32>
    %170 = math.rsqrt %169 : vector<8x1xf32>
    %171 = vector.broadcast %170 : vector<8x1xf32> to vector<8x64xf32>
    %172 = arith.mulf %161, %171 : vector<8x64xf32>
    %173 = vector.broadcast %162 : vector<1x64xf32> to vector<8x64xf32>
    %174 = arith.mulf %172, %173 : vector<8x64xf32>
    %c0_52 = arith.constant 0 : index
    %c0_53 = arith.constant 0 : index
    %175 = vector.load %arg14[%c0_52, %c0_53] : memref<64x128xf32, #tpu.memory_space<vmem>>, vector<64x128xf32>
    %cst_54 = arith.constant dense<0.000000e+00> : vector<8x128xf32>
    %176 = tpu.matmul %174, %175, %cst_54 {dimension_numbers = #tpu.dot_dimension_numbers<[1], [0], [0], [1], [0, 0, 1, 1], [], []>} : vector<8x64xf32>, vector<64x128xf32>, vector<8x128xf32> -> vector<8x128xf32>
    %c0_55 = arith.constant 0 : index
    %c0_56 = arith.constant 0 : index
    %177 = vector.load %arg15[%c0_55, %c0_56] : memref<64x128xf32, #tpu.memory_space<vmem>>, vector<64x128xf32>
    %cst_57 = arith.constant dense<0.000000e+00> : vector<8x128xf32>
    %178 = tpu.matmul %174, %177, %cst_57 {dimension_numbers = #tpu.dot_dimension_numbers<[1], [0], [0], [1], [0, 0, 1, 1], [], []>} : vector<8x64xf32>, vector<64x128xf32>, vector<8x128xf32> -> vector<8x128xf32>
    %179 = arith.negf %176 : vector<8x128xf32>
    %180 = math.exp %179 : vector<8x128xf32>
    %cst_58 = arith.constant 1.000000e+00 : f32
    %181 = vector.broadcast %cst_58 : f32 to vector<8x128xf32>
    %182 = arith.addf %181, %180 : vector<8x128xf32>
    %183 = arith.divf %181, %182 : vector<8x128xf32>
    %184 = arith.mulf %176, %183 : vector<8x128xf32>
    %185 = arith.mulf %184, %178 : vector<8x128xf32>
    %c0_59 = arith.constant 0 : index
    %c0_60 = arith.constant 0 : index
    %186 = vector.load %arg16[%c0_59, %c0_60] : memref<128x64xf32, #tpu.memory_space<vmem>>, vector<128x64xf32>
    %cst_61 = arith.constant dense<0.000000e+00> : vector<8x64xf32>
    %187 = tpu.matmul %185, %186, %cst_61 {dimension_numbers = #tpu.dot_dimension_numbers<[1], [0], [0], [1], [0, 0, 1, 1], [], []>} : vector<8x128xf32>, vector<128x64xf32>, vector<8x64xf32> -> vector<8x64xf32>
    %188 = arith.addf %161, %187 : vector<8x64xf32>
    %c0_62 = arith.constant 0 : index
    %c0_63 = arith.constant 0 : index
    %189 = vector.load %arg17[%c0_62, %c0_63] : memref<8x64xf32, #tpu.memory_space<vmem>>, vector<8x64xf32>
    tpu.vector_store %arg17[%c0_62, %c0_63], %188 {strides = array<i32>} : memref<8x64xf32, #tpu.memory_space<vmem>>, vector<8x64xf32>,
    return
  }
  func.func @transform_0(%arg0: i32) -> (i32, i32) {
    %c0_i32 = arith.constant 0 : i32
    %c0_i32_0 = arith.constant 0 : i32
    return %arg0, %c0_i32 : i32, i32
  }
  func.func @transform_1(%arg0: i32) -> (i32, i32) {
    %c0_i32 = arith.constant 0 : i32
    %c0_i32_0 = arith.constant 0 : i32
    return %arg0, %c0_i32 : i32, i32
  }
  func.func @transform_2(%arg0: i32) -> (i32, i32) {
    %c0_i32 = arith.constant 0 : i32
    %c0_i32_0 = arith.constant 0 : i32
    return %arg0, %c0_i32 : i32, i32
  }
  func.func @transform_3(%arg0: i32) -> (i32, i32, i32) {
    %c0_i32 = arith.constant 0 : i32
    %c0_i32_0 = arith.constant 0 : i32
    %c0_i32_1 = arith.constant 0 : i32
    return %arg0, %c0_i32, %c0_i32_0 : i32, i32, i32
  }
  func.func @transform_4(%arg0: i32) -> (i32, i32) {
    %c0_i32 = arith.constant 0 : i32
    %c0_i32_0 = arith.constant 0 : i32
    %c0_i32_1 = arith.constant 0 : i32
    return %c0_i32, %c0_i32_0 : i32, i32
  }
  func.func @transform_5(%arg0: i32) -> (i32, i32) {
    %c0_i32 = arith.constant 0 : i32
    %c0_i32_0 = arith.constant 0 : i32
    %c0_i32_1 = arith.constant 0 : i32
    return %c0_i32, %c0_i32_0 : i32, i32
  }
  func.func @transform_6(%arg0: i32) -> (i32, i32) {
    %c0_i32 = arith.constant 0 : i32
    %c0_i32_0 = arith.constant 0 : i32
    %c0_i32_1 = arith.constant 0 : i32
    return %c0_i32, %c0_i32_0 : i32, i32
  }
  func.func @transform_7(%arg0: i32) -> (i32, i32) {
    %c0_i32 = arith.constant 0 : i32
    %c0_i32_0 = arith.constant 0 : i32
    %c0_i32_1 = arith.constant 0 : i32
    return %c0_i32, %c0_i32_0 : i32, i32
  }
  func.func @transform_8(%arg0: i32) -> (i32, i32) {
    %c0_i32 = arith.constant 0 : i32
    %c0_i32_0 = arith.constant 0 : i32
    %c0_i32_1 = arith.constant 0 : i32
    return %c0_i32, %c0_i32_0 : i32, i32
  }
  func.func @transform_9(%arg0: i32) -> (i32, i32) {
    %c0_i32 = arith.constant 0 : i32
    %c0_i32_0 = arith.constant 0 : i32
    %c0_i32_1 = arith.constant 0 : i32
    return %c0_i32, %c0_i32_0 : i32, i32
  }
  func.func @transform_10(%arg0: i32) -> (i32, i32) {
    %c0_i32 = arith.constant 0 : i32
    %c0_i32_0 = arith.constant 0 : i32
    %c0_i32_1 = arith.constant 0 : i32
    return %c0_i32, %c0_i32_0 : i32, i32
  }
  func.func @transform_11(%arg0: i32) -> (i32, i32) {
    %c0_i32 = arith.constant 0 : i32
    %c0_i32_0 = arith.constant 0 : i32
    %c0_i32_1 = arith.constant 0 : i32
    return %c0_i32, %c0_i32_0 : i32, i32
  }
  func.func @transform_12(%arg0: i32) -> (i32, i32) {
    %c0_i32 = arith.constant 0 : i32
    %c0_i32_0 = arith.constant 0 : i32
    %c0_i32_1 = arith.constant 0 : i32
    return %c0_i32, %c0_i32_0 : i32, i32
  }
  func.func @transform_13(%arg0: i32) -> (i32, i32) {
    %c0_i32 = arith.constant 0 : i32
    %c0_i32_0 = arith.constant 0 : i32
    %c0_i32_1 = arith.constant 0 : i32
    return %c0_i32, %c0_i32_0 : i32, i32
  }
  func.func @transform_14(%arg0: i32) -> (i32, i32) {
    %c0_i32 = arith.constant 0 : i32
    %c0_i32_0 = arith.constant 0 : i32
    %c0_i32_1 = arith.constant 0 : i32
    return %c0_i32, %c0_i32_0 : i32, i32
  }
  func.func @transform_15(%arg0: i32) -> (i32, i32) {
    %c0_i32 = arith.constant 0 : i32
    %c0_i32_0 = arith.constant 0 : i32
    %c0_i32_1 = arith.constant 0 : i32
    return %c0_i32, %c0_i32_0 : i32, i32
  }
  func.func @transform_16(%arg0: i32) -> (i32, i32) {
    %c0_i32 = arith.constant 0 : i32
    %c0_i32_0 = arith.constant 0 : i32
    return %arg0, %c0_i32 : i32, i32
  }
}

</mosaic_0001>

<llo_original>
// kernel: decoder_layer.1
$region0: #{decoder_layer.1}
  #allocation0 [shape = 'u32[]', space=smem, size = 0x4, offset = 0x4, fixed_abs, tag = 'smem constant byte address 0x4 - core index']
  #allocation1 [shape = 'u32[144,128]{1,0:T(1,128)}', space=vmem, size = 0x12000, scoped, tag = 'internal scratch']
  %s0 = inlined_call_operand.vmem [shape: f32[16,64], index: 0, kind: input, shape index: {}]
  %s1 = inlined_call_operand.vmem [shape: f32[16,8], index: 1, kind: input, shape index: {}]
  %s2 = inlined_call_operand.vmem [shape: f32[16,8], index: 2, kind: input, shape index: {}]
  %s3 = inlined_call_operand.vmem [shape: f32[2,8,8], index: 3, kind: input, shape index: {}]
  %s4 = inlined_call_operand.vmem [shape: f32[1,64], index: 4, kind: input, shape index: {}, may-alias: {4,12}]
  %s5 = inlined_call_operand.vmem [shape: f32[64,32], index: 5, kind: input, shape index: {}]
  %s6 = inlined_call_operand.vmem [shape: f32[1,32], index: 6, kind: input, shape index: {}, may-alias: {6,9}]
  %s7 = inlined_call_operand.vmem [shape: f32[32,96], index: 7, kind: input, shape index: {}]
  %s8 = inlined_call_operand.vmem [shape: f32[64,40], index: 8, kind: input, shape index: {}]
  %s9 = inlined_call_operand.vmem [shape: f32[1,32], index: 9, kind: input, shape index: {}, may-alias: {6,9}]
  %s10 = inlined_call_operand.vmem [shape: f32[32,128], index: 10, kind: input, shape index: {}]
  %s11 = inlined_call_operand.vmem [shape: f32[64,64], index: 11, kind: input, shape index: {}]
  %s12 = inlined_call_operand.vmem [shape: f32[1,64], index: 12, kind: input, shape index: {}, may-alias: {4,12}]
  %s13 = inlined_call_operand.vmem [shape: f32[64,128], index: 13, kind: input, shape index: {}]
  %s14 = inlined_call_operand.vmem [shape: f32[64,128], index: 14, kind: input, shape index: {}]
  %s15 = inlined_call_operand.vmem [shape: f32[128,64], index: 15, kind: input, shape index: {}]
  %s16 = inlined_call_operand.hbm [shape: f32[16,64], index: 16, kind: output, shape index: {}]
  %s17 = sld [smem:[#allocation0]]
  $region97: #{decoder_layer.1} parent=0
    _
  %s19 = ssub.s32 1, %s17
  %s20 = scalar_select 0, %s19, %s17
  $region1: #{decoder_layer.1} parent=0
    #allocation2 [shape = 'u8[8192]{0}', space=vmem, size = 0x2000, scoped, tag = 'output window, operand 0']
    #allocation3 [shape = 's32[2]{0}', space=sflag, size = 0x8, scoped, tag = 'scoped memory for decoder_layer.1']
    %21 = vsyncpa [#allocation3], 0
    %s22 = scalar_lea.sflag [#allocation3], 1
    %23 = vsyncpa %s22, 0
    loop: start=0, step=1, limit=4
    $region2: #{decoder_layer.1} parent=1 // loop_pre_header
      _
    $region3: #{decoder_layer.1} parent=1 // loop_header
      %s25 = sphi 0, %s29
      %p26 = scmp.ge.s32.totalorder %s25, 4
      %s35 = sphi 0, %s37
      %s38 = sphi 0, %s35
      %s39 = sphi 0, %s38
      %s55 = sphi 0, %s39
      %s61 = sphi 0, %s63
      %s64 = sphi 0, %s61
      %s65 = sphi 0, %s64
      %s81 = sphi 0, %s65
      %s87 = sphi 0, %s89
      %s90 = sphi 0, %s87
      %s91 = sphi 0, %s90
      %s107 = sphi 0, %s91
      %s113 = sphi 0, %s115
      %s116 = sphi 0, %s113
      %s117 = sphi 0, %s116
      %s133 = sphi 0, %s117
      %s137 = sphi 0, %s137
      %s139 = sphi 0, %s137
      %s140 = sphi 0, %s139
      %s154 = sphi 0, %s140
      %s158 = sphi 0, %s158
      %s160 = sphi 0, %s158
      %s161 = sphi 0, %s160
      %s175 = sphi 0, %s161
      %s179 = sphi 0, %s179
      %s181 = sphi 0, %s179
      %s182 = sphi 0, %s181
      %s196 = sphi 0, %s182
      %s200 = sphi 0, %s200
      %s202 = sphi 0, %s200
      %s203 = sphi 0, %s202
      %s217 = sphi 0, %s203
      %s221 = sphi 0, %s221
      %s223 = sphi 0, %s221
      %s224 = sphi 0, %s223
      %s238 = sphi 0, %s224
      %s242 = sphi 0, %s242
      %s244 = sphi 0, %s242
      %s245 = sphi 0, %s244
      %s259 = sphi 0, %s245
      %s263 = sphi 0, %s263
      %s265 = sphi 0, %s263
      %s266 = sphi 0, %s265
      %s280 = sphi 0, %s266
      %s284 = sphi 0, %s284
      %s286 = sphi 0, %s284
      %s287 = sphi 0, %s286
      %s301 = sphi 0, %s287
      %s305 = sphi 0, %s305
      %s307 = sphi 0, %s305
      %s308 = sphi 0, %s307
      %s322 = sphi 0, %s308
      %s326 = sphi 0, %s326
      %s328 = sphi 0, %s326
      %s329 = sphi 0, %s328
      %s343 = sphi 0, %s329
      %s347 = sphi 0, %s347
      %s349 = sphi 0, %s347
      %s350 = sphi 0, %s349
      %s364 = sphi 0, %s350
      %s368 = sphi 0, %s368
      %s370 = sphi 0, %s368
      %s371 = sphi 0, %s370
      %s385 = sphi 0, %s371
      %s391 = sphi 0, %s393
      %s394 = sphi 0, %s391
      %s395 = sphi 0, %s394
      %s411 = sphi 0, %s395
    $region4: #{decoder_layer.1} parent=1 // loop_header_branch
      %28 = sbr.rel (%p26) target = $region8
    $region5: #{decoder_layer.1} parent=1 // loop_body
      %s30 = ssub.s32 %s25, 1
      %s31 = ssub.s32 %s25, 2
      %s32 = sadd.s32 %s25, 1
      %s33 = ssub.s32 %s25, %s32
      %p34 = scmp.eq.s32.totalorder %s33, 0
      %s36 = sadd.s32 %s35, 1
      %s37 = scalar_select %p34, %s35, %s36
      %p40 = pneg %p34
      %p41 = scmp.eq.s32.totalorder %s25, 1
      %p42 = por %p40, %p41
      %p43 = scmp.ne.s32.totalorder %s35, %s38
      %p44 = scmp.eq.s32.totalorder %s25, 0
      %p45 = por %p43, %p44
      %p46 = scmp.ne.s32.totalorder %s35, %s38
      %p47 = scmp.eq.s32.totalorder %s30, 1
      %p48 = por %p46, %p47
      %p49 = scmp.ne.s32.totalorder %s38, %s39
      %p50 = scmp.eq.s32.totalorder %s30, 0
      %p51 = por %p49, %p50
      %p52 = scmp.ne.s32.totalorder %s38, %s39
      %p53 = scmp.eq.s32.totalorder %s31, 1
      %p54 = por %p52, %p53
      %p56 = scmp.ne.s32.totalorder %s39, %s55
      %p57 = scmp.eq.s32.totalorder %s31, 0
      %p58 = por %p56, %p57
      %s59 = ssub.s32 %s25, %s32
      %p60 = scmp.eq.s32.totalorder %s59, 0
      %s62 = sadd.s32 %s61, 1
      %s63 = scalar_select %p60, %s61, %s62
      %p66 = pneg %p60
      %p67 = scmp.eq.s32.totalorder %s25, 1
      %p68 = por %p66, %p67
      %p69 = scmp.ne.s32.totalorder %s61, %s64
      %p70 = scmp.eq.s32.totalorder %s25, 0
      %p71 = por %p69, %p70
      %p72 = scmp.ne.s32.totalorder %s61, %s64
      %p73 = scmp.eq.s32.totalorder %s30, 1
      %p74 = por %p72, %p73
      %p75 = scmp.ne.s32.totalorder %s64, %s65
      %p76 = scmp.eq.s32.totalorder %s30, 0
      %p77 = por %p75, %p76
      %p78 = scmp.ne.s32.totalorder %s64, %s65
      %p79 = scmp.eq.s32.totalorder %s31, 1
      %p80 = por %p78, %p79
      %p82 = scmp.ne.s32.totalorder %s65, %s81
      %p83 = scmp.eq.s32.totalorder %s31, 0
      %p84 = por %p82, %p83
      %s85 = ssub.s32 %s25, %s32
      %p86 = scmp.eq.s32.totalorder %s85, 0
      %s88 = sadd.s32 %s87, 1
      %s89 = scalar_select %p86, %s87, %s88
      %p92 = pneg %p86
      %p93 = scmp.eq.s32.totalorder %s25, 1
      %p94 = por %p92, %p93
      %p95 = scmp.ne.s32.totalorder %s87, %s90
      %p96 = scmp.eq.s32.totalorder %s25, 0
      %p97 = por %p95, %p96
      %p98 = scmp.ne.s32.totalorder %s87, %s90
      %p99 = scmp.eq.s32.totalorder %s30, 1
      %p100 = por %p98, %p99
      %p101 = scmp.ne.s32.totalorder %s90, %s91
      %p102 = scmp.eq.s32.totalorder %s30, 0
      %p103 = por %p101, %p102
      %p104 = scmp.ne.s32.totalorder %s90, %s91
      %p105 = scmp.eq.s32.totalorder %s31, 1
      %p106 = por %p104, %p105
      %p108 = scmp.ne.s32.totalorder %s91, %s107
      %p109 = scmp.eq.s32.totalorder %s31, 0
      %p110 = por %p108, %p109
      %s111 = ssub.s32 %s25, %s32
      %p112 = scmp.eq.s32.totalorder %s111, 0
      %s114 = sadd.s32 %s113, 1
      %s115 = scalar_select %p112, %s113, %s114
      %p118 = pneg %p112
      %p119 = scmp.eq.s32.totalorder %s25, 1
      %p120 = por %p118, %p119
      %p121 = scmp.ne.s32.totalorder %s113, %s116
      %p122 = scmp.eq.s32.totalorder %s25, 0
      %p123 = por %p121, %p122
      %p124 = scmp.ne.s32.totalorder %s113, %s116
      %p125 = scmp.eq.s32.totalorder %s30, 1
      %p126 = por %p124, %p125
      %p127 = scmp.ne.s32.totalorder %s116, %s117
      %p128 = scmp.eq.s32.totalorder %s30, 0
      %p129 = por %p127, %p128
      %p130 = scmp.ne.s32.totalorder %s116, %s117
      %p131 = scmp.eq.s32.totalorder %s31, 1
      %p132 = por %p130, %p131
      %p134 = scmp.ne.s32.totalorder %s117, %s133
      %p135 = scmp.eq.s32.totalorder %s31, 0
      %p136 = por %p134, %p135
      %s138 = sadd.s32 %s137, 1
      %p141 = scmp.eq.s32.totalorder %s25, 1
      %p142 = scmp.ne.s32.totalorder %s137, %s139
      %p143 = scmp.eq.s32.totalorder %s25, 0
      %p144 = por %p142, %p143
      %p145 = scmp.ne.s32.totalorder %s137, %s139
      %p146 = scmp.eq.s32.totalorder %s30, 1
      %p147 = por %p145, %p146
      %p148 = scmp.ne.s32.totalorder %s139, %s140
      %p149 = scmp.eq.s32.totalorder %s30, 0
      %p150 = por %p148, %p149
      %p151 = scmp.ne.s32.totalorder %s139, %s140
      %p152 = scmp.eq.s32.totalorder %s31, 1
      %p153 = por %p151, %p152
      %p155 = scmp.ne.s32.totalorder %s140, %s154
      %p156 = scmp.eq.s32.totalorder %s31, 0
      %p157 = por %p155, %p156
      %s159 = sadd.s32 %s158, 1
      %p162 = scmp.eq.s32.totalorder %s25, 1
      %p163 = scmp.ne.s32.totalorder %s158, %s160
      %p164 = scmp.eq.s32.totalorder %s25, 0
      %p165 = por %p163, %p164
      %p166 = scmp.ne.s32.totalorder %s158, %s160
      %p167 = scmp.eq.s32.totalorder %s30, 1
      %p168 = por %p166, %p167
      %p169 = scmp.ne.s32.totalorder %s160, %s161
      %p170 = scmp.eq.s32.totalorder %s30, 0
      %p171 = por %p169, %p170
      %p172 = scmp.ne.s32.totalorder %s160, %s161
      %p173 = scmp.eq.s32.totalorder %s31, 1
      %p174 = por %p172, %p173
      %p176 = scmp.ne.s32.totalorder %s161, %s175
      %p177 = scmp.eq.s32.totalorder %s31, 0
      %p178 = por %p176, %p177
      %s180 = sadd.s32 %s179, 1
      %p183 = scmp.eq.s32.totalorder %s25, 1
      %p184 = scmp.ne.s32.totalorder %s179, %s181
      %p185 = scmp.eq.s32.totalorder %s25, 0
      %p186 = por %p184, %p185
      %p187 = scmp.ne.s32.totalorder %s179, %s181
      %p188 = scmp.eq.s32.totalorder %s30, 1
      %p189 = por %p187, %p188
      %p190 = scmp.ne.s32.totalorder %s181, %s182
      %p191 = scmp.eq.s32.totalorder %s30, 0
      %p192 = por %p190, %p191
      %p193 = scmp.ne.s32.totalorder %s181, %s182
      %p194 = scmp.eq.s32.totalorder %s31, 1
      %p195 = por %p193, %p194
      %p197 = scmp.ne.s32.totalorder %s182, %s196
      %p198 = scmp.eq.s32.totalorder %s31, 0
      %p199 = por %p197, %p198
      %s201 = sadd.s32 %s200, 1
      %p204 = scmp.eq.s32.totalorder %s25, 1
      %p205 = scmp.ne.s32.totalorder %s200, %s202
      %p206 = scmp.eq.s32.totalorder %s25, 0
      %p207 = por %p205, %p206
      %p208 = scmp.ne.s32.totalorder %s200, %s202
      %p209 = scmp.eq.s32.totalorder %s30, 1
      %p210 = por %p208, %p209
      %p211 = scmp.ne.s32.totalorder %s202, %s203
      %p212 = scmp.eq.s32.totalorder %s30, 0
      %p213 = por %p211, %p212
      %p214 = scmp.ne.s32.totalorder %s202, %s203
      %p215 = scmp.eq.s32.totalorder %s31, 1
      %p216 = por %p214, %p215
      %p218 = scmp.ne.s32.totalorder %s203, %s217
      %p219 = scmp.eq.s32.totalorder %s31, 0
      %p220 = por %p218, %p219
      %s222 = sadd.s32 %s221, 1
      %p225 = scmp.eq.s32.totalorder %s25, 1
      %p226 = scmp.ne.s32.totalorder %s221, %s223
      %p227 = scmp.eq.s32.totalorder %s25, 0
      %p228 = por %p226, %p227
      %p229 = scmp.ne.s32.totalorder %s221, %s223
      %p230 = scmp.eq.s32.totalorder %s30, 1
      %p231 = por %p229, %p230
      %p232 = scmp.ne.s32.totalorder %s223, %s224
      %p233 = scmp.eq.s32.totalorder %s30, 0
      %p234 = por %p232, %p233
      %p235 = scmp.ne.s32.totalorder %s223, %s224
      %p236 = scmp.eq.s32.totalorder %s31, 1
      %p237 = por %p235, %p236
      %p239 = scmp.ne.s32.totalorder %s224, %s238
      %p240 = scmp.eq.s32.totalorder %s31, 0
      %p241 = por %p239, %p240
      %s243 = sadd.s32 %s242, 1
      %p246 = scmp.eq.s32.totalorder %s25, 1
      %p247 = scmp.ne.s32.totalorder %s242, %s244
      %p248 = scmp.eq.s32.totalorder %s25, 0
      %p249 = por %p247, %p248
      %p250 = scmp.ne.s32.totalorder %s242, %s244
      %p251 = scmp.eq.s32.totalorder %s30, 1
      %p252 = por %p250, %p251
      %p253 = scmp.ne.s32.totalorder %s244, %s245
      %p254 = scmp.eq.s32.totalorder %s30, 0
      %p255 = por %p253, %p254
      %p256 = scmp.ne.s32.totalorder %s244, %s245
      %p257 = scmp.eq.s32.totalorder %s31, 1
      %p258 = por %p256, %p257
      %p260 = scmp.ne.s32.totalorder %s245, %s259
      %p261 = scmp.eq.s32.totalorder %s31, 0
      %p262 = por %p260, %p261
      %s264 = sadd.s32 %s263, 1
      %p267 = scmp.eq.s32.totalorder %s25, 1
      %p268 = scmp.ne.s32.totalorder %s263, %s265
      %p269 = scmp.eq.s32.totalorder %s25, 0
      %p270 = por %p268, %p269
      %p271 = scmp.ne.s32.totalorder %s263, %s265
      %p272 = scmp.eq.s32.totalorder %s30, 1
      %p273 = por %p271, %p272
      %p274 = scmp.ne.s32.totalorder %s265, %s266
      %p275 = scmp.eq.s32.totalorder %s30, 0
      %p276 = por %p274, %p275
      %p277 = scmp.ne.s32.totalorder %s265, %s266
      %p278 = scmp.eq.s32.totalorder %s31, 1
      %p279 = por %p277, %p278
      %p281 = scmp.ne.s32.totalorder %s266, %s280
      %p282 = scmp.eq.s32.totalorder %s31, 0
      %p283 = por %p281, %p282
      %s285 = sadd.s32 %s284, 1
      %p288 = scmp.eq.s32.totalorder %s25, 1
      %p289 = scmp.ne.s32.totalorder %s284, %s286
      %p290 = scmp.eq.s32.totalorder %s25, 0
      %p291 = por %p289, %p290
      %p292 = scmp.ne.s32.totalorder %s284, %s286
      %p293 = scmp.eq.s32.totalorder %s30, 1
      %p294 = por %p292, %p293
      %p295 = scmp.ne.s32.totalorder %s286, %s287
      %p296 = scmp.eq.s32.totalorder %s30, 0
      %p297 = por %p295, %p296
      %p298 = scmp.ne.s32.totalorder %s286, %s287
      %p299 = scmp.eq.s32.totalorder %s31, 1
      %p300 = por %p298, %p299
      %p302 = scmp.ne.s32.totalorder %s287, %s301
      %p303 = scmp.eq.s32.totalorder %s31, 0
      %p304 = por %p302, %p303
      %s306 = sadd.s32 %s305, 1
      %p309 = scmp.eq.s32.totalorder %s25, 1
      %p310 = scmp.ne.s32.totalorder %s305, %s307
      %p311 = scmp.eq.s32.totalorder %s25, 0
      %p312 = por %p310, %p311
      %p313 = scmp.ne.s32.totalorder %s305, %s307
      %p314 = scmp.eq.s32.totalorder %s30, 1
      %p315 = por %p313, %p314
      %p316 = scmp.ne.s32.totalorder %s307, %s308
      %p317 = scmp.eq.s32.totalorder %s30, 0
      %p318 = por %p316, %p317
      %p319 = scmp.ne.s32.totalorder %s307, %s308
      %p320 = scmp.eq.s32.totalorder %s31, 1
      %p321 = por %p319, %p320
      %p323 = scmp.ne.s32.totalorder %s308, %s322
      %p324 = scmp.eq.s32.totalorder %s31, 0
      %p325 = por %p323, %p324
      %s327 = sadd.s32 %s326, 1
      %p330 = scmp.eq.s32.totalorder %s25, 1
      %p331 = scmp.ne.s32.totalorder %s326, %s328
      %p332 = scmp.eq.s32.totalorder %s25, 0
      %p333 = por %p331, %p332
      %p334 = scmp.ne.s32.totalorder %s326, %s328
      %p335 = scmp.eq.s32.totalorder %s30, 1
      %p336 = por %p334, %p335
      %p337 = scmp.ne.s32.totalorder %s328, %s329
      %p338 = scmp.eq.s32.totalorder %s30, 0
      %p339 = por %p337, %p338
      %p340 = scmp.ne.s32.totalorder %s328, %s329
      %p341 = scmp.eq.s32.totalorder %s31, 1
      %p342 = por %p340, %p341
      %p344 = scmp.ne.s32.totalorder %s329, %s343
      %p345 = scmp.eq.s32.totalorder %s31, 0
      %p346 = por %p344, %p345
      %s348 = sadd.s32 %s347, 1
      %p351 = scmp.eq.s32.totalorder %s25, 1
      %p352 = scmp.ne.s32.totalorder %s347, %s349
      %p353 = scmp.eq.s32.totalorder %s25, 0
      %p354 = por %p352, %p353
      %p355 = scmp.ne.s32.totalorder %s347, %s349
      %p356 = scmp.eq.s32.totalorder %s30, 1
      %p357 = por %p355, %p356
      %p358 = scmp.ne.s32.totalorder %s349, %s350
      %p359 = scmp.eq.s32.totalorder %s30, 0
      %p360 = por %p358, %p359
      %p361 = scmp.ne.s32.totalorder %s349, %s350
      %p362 = scmp.eq.s32.totalorder %s31, 1
      %p363 = por %p361, %p362
      %p365 = scmp.ne.s32.totalorder %s350, %s364
      %p366 = scmp.eq.s32.totalorder %s31, 0
      %p367 = por %p365, %p366
      %s369 = sadd.s32 %s368, 1
      %p372 = scmp.eq.s32.totalorder %s25, 1
      %p373 = scmp.ne.s32.totalorder %s368, %s370
      %p374 = scmp.eq.s32.totalorder %s25, 0
      %p375 = por %p373, %p374
      %p376 = scmp.ne.s32.totalorder %s368, %s370
      %p377 = scmp.eq.s32.totalorder %s30, 1
      %p378 = por %p376, %p377
      %p379 = scmp.ne.s32.totalorder %s370, %s371
      %p380 = scmp.eq.s32.totalorder %s30, 0
      %p381 = por %p379, %p380
      %p382 = scmp.ne.s32.totalorder %s370, %s371
      %p383 = scmp.eq.s32.totalorder %s31, 1
      %p384 = por %p382, %p383
      %p386 = scmp.ne.s32.totalorder %s371, %s385
      %p387 = scmp.eq.s32.totalorder %s31, 0
      %p388 = por %p386, %p387
      %s389 = ssub.s32 %s25, %s32
      %p390 = scmp.eq.s32.totalorder %s389, 0
      %s392 = sadd.s32 %s391, 1
      %s393 = scalar_select %p390, %s391, %s392
      %p396 = pneg %p390
      %p397 = scmp.eq.s32.totalorder %s25, 1
      %p398 = por %p396, %p397
      %p399 = scmp.ne.s32.totalorder %s391, %s394
      %p400 = scmp.eq.s32.totalorder %s25, 0
      %p401 = por %p399, %p400
      %p402 = scmp.ne.s32.totalorder %s391, %s394
      %p403 = scmp.eq.s32.totalorder %s30, 1
      %p404 = por %p402, %p403
      %p405 = scmp.ne.s32.totalorder %s394, %s395
      %p406 = scmp.eq.s32.totalorder %s30, 0
      %p407 = por %p405, %p406
      %p408 = scmp.ne.s32.totalorder %s394, %s395
      %p409 = scmp.eq.s32.totalorder %s31, 1
      %p410 = por %p408, %p409
      %p412 = scmp.ne.s32.totalorder %s395, %s411
      %p413 = scmp.eq.s32.totalorder %s31, 0
      %p414 = por %p412, %p413
      %p415 = scmp.le.s32.totalorder 1, %s25
      %p416 = scmp.lt.s32.totalorder %s25, 3
      %p417 = pnand %p415, %p416
      %p418 = pneg %p417
      // Predicated region
      $region9: #{decoder_layer.1} parent=5 // pred_check
        _
      $region10: #{decoder_layer.1} parent=5 // pred_check_branch
        %420 = sbr.rel (%p417) target = $region12
      $region11: #{decoder_layer.1} parent=5 // pred_region
        %s421 = ssub.s32 %s25, 1
        // Predicated region
        $region13: #{decoder_layer.1} parent=11 // pred_check
          %p422 = pneg %p150
        $region14: #{decoder_layer.1} parent=11 // pred_check_branch
          %424 = sbr.rel (%p422) target = $region16
        $region15: #{decoder_layer.1} parent=11 // pred_region
          _
        $region16: #{decoder_layer.1} parent=11 // pred_fallthru
          _
        // Predicated region
        $region17: #{decoder_layer.1} parent=11 // pred_check
          %p425 = pneg %p171
        $region18: #{decoder_layer.1} parent=11 // pred_check_branch
          %427 = sbr.rel (%p425) target = $region20
        $region19: #{decoder_layer.1} parent=11 // pred_region
          _
        $region20: #{decoder_layer.1} parent=11 // pred_fallthru
          _
        // Predicated region
        $region21: #{decoder_layer.1} parent=11 // pred_check
          %p428 = pneg %p192
        $region22: #{decoder_layer.1} parent=11 // pred_check_branch
          %430 = sbr.rel (%p428) target = $region24
        $region23: #{decoder_layer.1} parent=11 // pred_region
          _
        $region24: #{decoder_layer.1} parent=11 // pred_fallthru
          _
        // Predicated region
        $region25: #{decoder_layer.1} parent=11 // pred_check
          %p431 = pneg %p213
        $region26: #{decoder_layer.1} parent=11 // pred_check_branch
          %433 = sbr.rel (%p431) target = $region28
        $region27: #{decoder_layer.1} parent=11 // pred_region
          _
        $region28: #{decoder_layer.1} parent=11 // pred_fallthru
          _
        // Predicated region
        $region29: #{decoder_layer.1} parent=11 // pred_check
          %p434 = pneg %p234
        $region30: #{decoder_layer.1} parent=11 // pred_check_branch
          %436 = sbr.rel (%p434) target = $region32
        $region31: #{decoder_layer.1} parent=11 // pred_region
          _
        $region32: #{decoder_layer.1} parent=11 // pred_fallthru
          _
        // Predicated region
        $region33: #{decoder_layer.1} parent=11 // pred_check
          %p437 = pneg %p255
        $region34: #{decoder_layer.1} parent=11 // pred_check_branch
          %439 = sbr.rel (%p437) target = $region36
        $region35: #{decoder_layer.1} parent=11 // pred_region
          _
        $region36: #{decoder_layer.1} parent=11 // pred_fallthru
          _
        // Predicated region
        $region37: #{decoder_layer.1} parent=11 // pred_check
          %p440 = pneg %p276
        $region38: #{decoder_layer.1} parent=11 // pred_check_branch
          %442 = sbr.rel (%p440) target = $region40
        $region39: #{decoder_layer.1} parent=11 // pred_region
          _
        $region40: #{decoder_layer.1} parent=11 // pred_fallthru
          _
        // Predicated region
        $region41: #{decoder_layer.1} parent=11 // pred_check
          %p443 = pneg %p297
        $region42: #{decoder_layer.1} parent=11 // pred_check_branch
          %445 = sbr.rel (%p443) target = $region44
        $region43: #{decoder_layer.1} parent=11 // pred_region
          _
        $region44: #{decoder_layer.1} parent=11 // pred_fallthru
          _
        // Predicated region
        $region45: #{decoder_layer.1} parent=11 // pred_check
          %p446 = pneg %p318
        $region46: #{decoder_layer.1} parent=11 // pred_check_branch
          %448 = sbr.rel (%p446) target = $region48
        $region47: #{decoder_layer.1} parent=11 // pred_region
          _
        $region48: #{decoder_layer.1} parent=11 // pred_fallthru
          _
        // Predicated region
        $region49: #{decoder_layer.1} parent=11 // pred_check
          %p449 = pneg %p339
        $region50: #{decoder_layer.1} parent=11 // pred_check_branch
          %451 = sbr.rel (%p449) target = $region52
        $region51: #{decoder_layer.1} parent=11 // pred_region
          _
        $region52: #{decoder_layer.1} parent=11 // pred_fallthru
          _
        // Predicated region
        $region53: #{decoder_layer.1} parent=11 // pred_check
          %p452 = pneg %p360
        $region54: #{decoder_layer.1} parent=11 // pred_check_branch
          %454 = sbr.rel (%p452) target = $region56
        $region55: #{decoder_layer.1} parent=11 // pred_region
          _
        $region56: #{decoder_layer.1} parent=11 // pred_fallthru
          _
        // Predicated region
        $region57: #{decoder_layer.1} parent=11 // pred_check
          %p455 = pneg %p381
        $region58: #{decoder_layer.1} parent=11 // pred_check_branch
          %457 = sbr.rel (%p455) target = $region60
        $region59: #{decoder_layer.1} parent=11 // pred_region
          _
        $region60: #{decoder_layer.1} parent=11 // pred_fallthru
          _
      $region12: #{decoder_layer.1} parent=5 // pred_fallthru
        _
      %p458 = scmp.lt.s32.totalorder %s25, 2
      // Predicated region
      $region61: #{decoder_layer.1} parent=5 // pred_check
        %p459 = pneg %p458
      $region62: #{decoder_layer.1} parent=5 // pred_check_branch
        %461 = sbr.rel (%p459) target = $region64
      $region63: #{decoder_layer.1} parent=5 // pred_region
        // Predicated region
        $region65: #{decoder_layer.1} parent=63 // pred_check
          %p462 = pneg %p45
        $region66: #{decoder_layer.1} parent=63 // pred_check_branch
          %464 = sbr.rel (%p462) target = $region68
        $region67: #{decoder_layer.1} parent=63 // pred_region
          %p465 = scmp.lt.s32.totalorder %s25, 1
          %s466 = scalar_select %p465, %s25, 1
          %s467 = smul.addr %s466, 8
          %s468 = scalar_lea.vmem %s0, %s467
        $region68: #{decoder_layer.1} parent=63 // pred_fallthru
          _
        // Predicated region
        $region69: #{decoder_layer.1} parent=63 // pred_check
          %p469 = pneg %p71
        $region70: #{decoder_layer.1} parent=63 // pred_check_branch
          %471 = sbr.rel (%p469) target = $region72
        $region71: #{decoder_layer.1} parent=63 // pred_region
          %p472 = scmp.lt.s32.totalorder %s25, 1
          %s473 = scalar_select %p472, %s25, 1
          %s474 = smul.addr %s473, 8
          %s475 = scalar_lea.vmem %s1, %s474
        $region72: #{decoder_layer.1} parent=63 // pred_fallthru
          _
        // Predicated region
        $region73: #{decoder_layer.1} parent=63 // pred_check
          %p476 = pneg %p97
        $region74: #{decoder_layer.1} parent=63 // pred_check_branch
          %478 = sbr.rel (%p476) target = $region76
        $region75: #{decoder_layer.1} parent=63 // pred_region
          %p479 = scmp.lt.s32.totalorder %s25, 1
          %s480 = scalar_select %p479, %s25, 1
          %s481 = smul.addr %s480, 8
          %s482 = scalar_lea.vmem %s2, %s481
        $region76: #{decoder_layer.1} parent=63 // pred_fallthru
          _
        // Predicated region
        $region77: #{decoder_layer.1} parent=63 // pred_check
          %p483 = pneg %p123
        $region78: #{decoder_layer.1} parent=63 // pred_check_branch
          %485 = sbr.rel (%p483) target = $region80
        $region79: #{decoder_layer.1} parent=63 // pred_region
          %p486 = scmp.lt.s32.totalorder %s25, 1
          %s487 = scalar_select %p486, %s25, 1
          %s488 = smul.addr %s487, 8
          %s489 = scalar_lea.vmem %s3, %s488
        $region80: #{decoder_layer.1} parent=63 // pred_fallthru
          _
      $region64: #{decoder_layer.1} parent=5 // pred_fallthru
        _
      %p490 = scmp.le.s32.totalorder 1, %s25
      %p491 = scmp.lt.s32.totalorder %s25, 3
      %p492 = pnand %p490, %p491
      %p493 = pneg %p492
      // Predicated region
      $region81: #{decoder_layer.1} parent=5 // pred_check
        _
      $region82: #{decoder_layer.1} parent=5 // pred_check_branch
        %495 = sbr.rel (%p492) target = $region84
      $region83: #{decoder_layer.1} parent=5 // pred_region
        %s496 = ssub.s32 %s25, 1
        %p497 = scmp.lt.s32.totalorder %s30, 1
        %s498 = scalar_select %p497, %s30, 1
        %s499 = smul.addr %s498, 8
        %s500 = scalar_lea.vmem %s0, %s499
        %p501 = pneg %p51
        %p502 = pneg %p48
        %p503 = scmp.lt.s32.totalorder %s30, 1
        %s504 = scalar_select %p503, %s30, 1
        %s505 = smul.addr %s504, 8
        %s506 = scalar_lea.vmem %s1, %s505
        %p507 = pneg %p77
        %p508 = pneg %p74
        %p509 = scmp.lt.s32.totalorder %s30, 1
        %s510 = scalar_select %p509, %s30, 1
        %s511 = smul.addr %s510, 8
        %s512 = scalar_lea.vmem %s2, %s511
        %p513 = pneg %p103
        %p514 = pneg %p100
        %p515 = scmp.lt.s32.totalorder %s30, 1
        %s516 = scalar_select %p515, %s30, 1
        %s517 = smul.addr %s516, 8
        %s518 = scalar_lea.vmem %s3, %s517
        %p519 = pneg %p129
        %p520 = pneg %p126
        %p521 = pneg %p150
        %p522 = pneg %p147
        %p523 = pneg %p171
        %p524 = pneg %p168
        %p525 = pneg %p192
        %p526 = pneg %p189
        %p527 = pneg %p213
        %p528 = pneg %p210
        %p529 = pneg %p234
        %p530 = pneg %p231
        %p531 = pneg %p255
        %p532 = pneg %p252
        %p533 = pneg %p276
        %p534 = pneg %p273
        %p535 = pneg %p297
        %p536 = pneg %p294
        %p537 = pneg %p318
        %p538 = pneg %p315
        %p539 = pneg %p339
        %p540 = pneg %p336
        %p541 = pneg %p360
        %p542 = pneg %p357
        %p543 = pneg %p381
        %p544 = pneg %p378
        %p545 = pneg %p407
        %p546 = pneg %p404
        %s547 = sand.u32 %s394, 1
        %s548 = scalar_lea.sflag [#allocation3], %s547
        %s549 = sand.u32 %s394, 1
        %s550 = smul.addr %s549, 8
        %s551 = scalar_lea.vmem [#allocation2], %s550
        %p552 = scmp.lt.s32.totalorder %s30, 1
        %s553 = scalar_select %p552, %s30, 1
        %s554 = smul.addr %s553, 8
        %s555 = scalar_lea.vmem %s0, %s554
        %p556 = scmp.lt.s32.totalorder %s30, 1
        %s557 = scalar_select %p556, %s30, 1
        %s558 = smul.addr %s557, 8
        %s559 = scalar_lea.vmem %s1, %s558
        %p560 = scmp.lt.s32.totalorder %s30, 1
        %s561 = scalar_select %p560, %s30, 1
        %s562 = smul.addr %s561, 8
        %s563 = scalar_lea.vmem %s2, %s562
        %p564 = scmp.lt.s32.totalorder %s30, 1
        %s565 = scalar_select %p564, %s30, 1
        %s566 = smul.addr %s565, 8
        %s567 = scalar_lea.vmem %s3, %s566
        %v568 = vld [vmem:[%s555] sm:$0xff]
        %v569 = vld [vmem:[%s559] sm:$0xff]
        %v570 = vld [vmem:[%s563] sm:$0xff]
        %v571 = vld [vmem:[%s567] sm:$0xff]
        %v572 = vld [vmem:[%s4] sm:$0x1]
        %v573 = vmul.f32 %v568, %v568
        %vm574 = vcmask 523264
        %v575 = vsel %vm574, %v573, 0.0
        %576 = vadd.xlane.f32.xlu0 %v575
        %v577 = vpop.xlane.xlu0 %576
        %v578 = vrcp.pop 64.0
        %v579 = vmul.f32 %v577, %v578
        %v580 = vadd.f32 %v579, 1e-06
        %v581 = vrsqrt.pop %v580
        %v582 = vmul.f32 %v568, %v581
        %v584 = vlaneseq
        %v585 = vshrl.u32 %v584, 7
        %v586 = vsub.s32 0, %v585
        %v587 = vrot.slane %v572, %v586
        %v589 = vmul.f32 %v582, %v587
        %v590 = vld [vmem:[%s5] sm:$0xff]
        %v591 = vld [vmem:[%s5 + $0x8] sm:$0xff]
        %v592 = vld [vmem:[%s5 + $0x10] sm:$0xff]
        %v593 = vld [vmem:[%s5 + $0x18] sm:$0xff]
        %v594 = vld [vmem:[%s5 + $0x20] sm:$0xff]
        %v595 = vld [vmem:[%s5 + $0x28] sm:$0xff]
        %v596 = vld [vmem:[%s5 + $0x30] sm:$0xff]
        %v597 = vld [vmem:[%s5 + $0x38] sm:$0xff]
        %v599 = vsel %vm574, %v589, 0
        %601 = vmatprep.subr.mxu0 0.0
        %602 = vmatpush1.msra.mxu0 0.0
        %603 = vmatprep.subr.mxu0 0.0
        %604 = vmatpush1.msra.mxu0 0.0
        %605 = vmatprep.subr.mxu0 0.0
        %606 = vmatpush1.msra.mxu0 0.0
        %607 = vmatprep.subr.mxu0 0.0
        %608 = vmatpush1.msra.mxu0 0.0
        %609 = vmatprep.subr.mxu0 0.0
        %610 = vmatpush1.msra.mxu0 0.0
        %611 = vmatprep.subr.mxu0 0.0
        %612 = vmatpush1.msra.mxu0 0.0
        %613 = vmatprep.subr.mxu0 0.0
        %614 = vmatpush1.msra.mxu0 0.0
        %615 = vmatprep.subr.mxu0 0.0
        %616 = vmatpush1.msra.mxu0 0.0
        %617 = vmatprep.subr.mxu0 0.0
        %618 = vmatpush1.msra.mxu0 %v597
        %619 = vmatprep.subr.mxu0 0.0
        %620 = vmatpush1.msra.mxu0 %v596
        %621 = vmatprep.subr.mxu0 0.0
        %622 = vmatpush1.msra.mxu0 %v595
        %623 = vmatprep.subr.mxu0 0.0
        %624 = vmatpush1.msra.mxu0 %v594
        %625 = vmatprep.subr.mxu0 0.0
        %626 = vmatpush1.msra.mxu0 %v593
        %627 = vmatprep.subr.mxu0 0.0
        %628 = vmatpush1.msra.mxu0 %v592
        %629 = vmatprep.subr.mxu0 0.0
        %630 = vmatpush1.msra.mxu0 %v591
        %631 = vmatprep.subr.mxu0 0.0
        %632 = vmatpush1.msra.mxu0 %v590
        %633 = vmatprep.subr.mxu0 0.0
        %634 = vmatpush2.msra.mxu0 0.0
        %635 = vmatprep.subr.mxu0 0.0
        %636 = vmatpush2.msra.mxu0 0.0
        %637 = vmatprep.subr.mxu0 0.0
        %638 = vmatpush2.msra.mxu0 0.0
        %639 = vmatprep.subr.mxu0 0.0
        %640 = vmatpush2.msra.mxu0 0.0
        %641 = vmatprep.subr.mxu0 0.0
        %642 = vmatpush2.msra.mxu0 0.0
        %643 = vmatprep.subr.mxu0 0.0
        %644 = vmatpush2.msra.mxu0 0.0
        %645 = vmatprep.subr.mxu0 0.0
        %646 = vmatpush2.msra.mxu0 0.0
        %647 = vmatprep.subr.mxu0 0.0
        %648 = vmatpush2.msra.mxu0 0.0
        %649 = vmatprep.subr.mxu0 0.0
        %650 = vmatpush2.msra.mxu0 0.0
        %651 = vmatprep.subr.mxu0 0.0
        %652 = vmatpush2.msra.mxu0 0.0
        %653 = vmatprep.subr.mxu0 0.0
        %654 = vmatpush2.msra.mxu0 0.0
        %655 = vmatprep.subr.mxu0 0.0
        %656 = vmatpush2.msra.mxu0 0.0
        %657 = vmatprep.subr.mxu0 0.0
        %658 = vmatpush2.msra.mxu0 0.0
        %659 = vmatprep.subr.mxu0 0.0
        %660 = vmatpush2.msra.mxu0 0.0
        %661 = vmatprep.subr.mxu0 0.0
        %662 = vmatpush2.msra.mxu0 0.0
        %663 = vmatprep.subr.mxu0 0.0
        %664 = vmatpush2.msra.mxu0 0.0
        %665 = vmatprep.mubr.f32.mxu0 0.0
        %666 = vmatmul.mubr.f32.gmra.mxu0 %v599
        %v667 = vpop.f32.mrf.mxu0
        %v668 = vadd.f32 0.0, %v667
        %v669 = vpop.f32.mrf.mxu0
        %670 = vdwg.mxu0
        %v671 = vld [vmem:[%s6] sm:$0x1]
        %v672 = vmul.f32 %v668, %v668
        %vm673 = vcmask 261120
        %v674 = vsel %vm673, %v672, 0.0
        %675 = vadd.xlane.f32.xlu0 %v674
        %v676 = vpop.xlane.xlu0 %675
        %v677 = vrcp.pop 32.0
        %v678 = vmul.f32 %v676, %v677
        %v679 = vadd.f32 %v678, 1e-06
        %v680 = vrsqrt.pop %v679
        %v681 = vmul.f32 %v668, %v680
        %v683 = vlaneseq
        %v684 = vshrl.u32 %v683, 7
        %v685 = vsub.s32 0, %v684
        %v686 = vrot.slane %v671, %v685
        %v688 = vmul.f32 %v681, %v686
        %v689 = vld [vmem:[%s7] sm:$0xff]
        %v690 = vld [vmem:[%s7 + $0x8] sm:$0xff]
        %v691 = vld [vmem:[%s7 + $0x10] sm:$0xff]
        %v692 = vld [vmem:[%s7 + $0x18] sm:$0xff]
        %v694 = vsel %vm673, %v688, 0
        %696 = vmatprep.subr.mxu0 0.0
        %697 = vmatpush1.msra.mxu0 0.0
        %698 = vmatprep.subr.mxu0 0.0
        %699 = vmatpush1.msra.mxu0 0.0
        %700 = vmatprep.subr.mxu0 0.0
        %701 = vmatpush1.msra.mxu0 0.0
        %702 = vmatprep.subr.mxu0 0.0
        %703 = vmatpush1.msra.mxu0 0.0
        %704 = vmatprep.subr.mxu0 0.0
        %705 = vmatpush1.msra.mxu0 0.0
        %706 = vmatprep.subr.mxu0 0.0
        %707 = vmatpush1.msra.mxu0 0.0
        %708 = vmatprep.subr.mxu0 0.0
        %709 = vmatpush1.msra.mxu0 0.0
        %710 = vmatprep.subr.mxu0 0.0
        %711 = vmatpush1.msra.mxu0 0.0
        %712 = vmatprep.subr.mxu0 0.0
        %713 = vmatpush1.msra.mxu0 0.0
        %714 = vmatprep.subr.mxu0 0.0
        %715 = vmatpush1.msra.mxu0 0.0
        %716 = vmatprep.subr.mxu0 0.0
        %717 = vmatpush1.msra.mxu0 0.0
        %718 = vmatprep.subr.mxu0 0.0
        %719 = vmatpush1.msra.mxu0 0.0
        %720 = vmatprep.subr.mxu0 0.0
        %721 = vmatpush1.msra.mxu0 %v692
        %722 = vmatprep.subr.mxu0 0.0
        %723 = vmatpush1.msra.mxu0 %v691
        %724 = vmatprep.subr.mxu0 0.0
        %725 = vmatpush1.msra.mxu0 %v690
        %726 = vmatprep.subr.mxu0 0.0
        %727 = vmatpush1.msra.mxu0 %v689
        %728 = vmatprep.subr.mxu0 0.0
        %729 = vmatpush2.msra.mxu0 0.0
        %730 = vmatprep.subr.mxu0 0.0
        %731 = vmatpush2.msra.mxu0 0.0
        %732 = vmatprep.subr.mxu0 0.0
        %733 = vmatpush2.msra.mxu0 0.0
        %734 = vmatprep.subr.mxu0 0.0
        %735 = vmatpush2.msra.mxu0 0.0
        %736 = vmatprep.subr.mxu0 0.0
        %737 = vmatpush2.msra.mxu0 0.0
        %738 = vmatprep.subr.mxu0 0.0
        %739 = vmatpush2.msra.mxu0 0.0
        %740 = vmatprep.subr.mxu0 0.0
        %741 = vmatpush2.msra.mxu0 0.0
        %742 = vmatprep.subr.mxu0 0.0
        %743 = vmatpush2.msra.mxu0 0.0
        %744 = vmatprep.subr.mxu0 0.0
        %745 = vmatpush2.msra.mxu0 0.0
        %746 = vmatprep.subr.mxu0 0.0
        %747 = vmatpush2.msra.mxu0 0.0
        %748 = vmatprep.subr.mxu0 0.0
        %749 = vmatpush2.msra.mxu0 0.0
        %750 = vmatprep.subr.mxu0 0.0
        %751 = vmatpush2.msra.mxu0 0.0
        %752 = vmatprep.subr.mxu0 0.0
        %753 = vmatpush2.msra.mxu0 0.0
        %754 = vmatprep.subr.mxu0 0.0
        %755 = vmatpush2.msra.mxu0 0.0
        %756 = vmatprep.subr.mxu0 0.0
        %757 = vmatpush2.msra.mxu0 0.0
        %758 = vmatprep.subr.mxu0 0.0
        %759 = vmatpush2.msra.mxu0 0.0
        %760 = vmatprep.mubr.f32.mxu0 0.0
        %761 = vmatmul.mubr.f32.gmra.mxu0 %v694
        %v762 = vpop.f32.mrf.mxu0
        %v763 = vadd.f32 0.0, %v762
        %v764 = vpop.f32.mrf.mxu0
        %765 = vdwg.mxu0
        %v766 = vld [vmem:[%s8] sm:$0xff]
        %v767 = vld [vmem:[%s8 + $0x8] sm:$0xff]
        %v768 = vld [vmem:[%s8 + $0x10] sm:$0xff]
        %v769 = vld [vmem:[%s8 + $0x18] sm:$0xff]
        %v770 = vld [vmem:[%s8 + $0x20] sm:$0xff]
        %v771 = vld [vmem:[%s8 + $0x28] sm:$0xff]
        %v772 = vld [vmem:[%s8 + $0x30] sm:$0xff]
        %v773 = vld [vmem:[%s8 + $0x38] sm:$0xff]
        %774 = vmatprep.subr.mxu0 0.0
        %775 = vmatpush1.msra.mxu0 0.0
        %776 = vmatprep.subr.mxu0 0.0
        %777 = vmatpush1.msra.mxu0 0.0
        %778 = vmatprep.subr.mxu0 0.0
        %779 = vmatpush1.msra.mxu0 0.0
        %780 = vmatprep.subr.mxu0 0.0
        %781 = vmatpush1.msra.mxu0 0.0
        %782 = vmatprep.subr.mxu0 0.0
        %783 = vmatpush1.msra.mxu0 0.0
        %784 = vmatprep.subr.mxu0 0.0
        %785 = vmatpush1.msra.mxu0 0.0
        %786 = vmatprep.subr.mxu0 0.0
        %787 = vmatpush1.msra.mxu0 0.0
        %788 = vmatprep.subr.mxu0 0.0
        %789 = vmatpush1.msra.mxu0 0.0
        %790 = vmatprep.subr.mxu0 0.0
        %791 = vmatpush1.msra.mxu0 %v773
        %792 = vmatprep.subr.mxu0 0.0
        %793 = vmatpush1.msra.mxu0 %v772
        %794 = vmatprep.subr.mxu0 0.0
        %795 = vmatpush1.msra.mxu0 %v771
        %796 = vmatprep.subr.mxu0 0.0
        %797 = vmatpush1.msra.mxu0 %v770
        %798 = vmatprep.subr.mxu0 0.0
        %799 = vmatpush1.msra.mxu0 %v769
        %800 = vmatprep.subr.mxu0 0.0
        %801 = vmatpush1.msra.mxu0 %v768
        %802 = vmatprep.subr.mxu0 0.0
        %803 = vmatpush1.msra.mxu0 %v767
        %804 = vmatprep.subr.mxu0 0.0
        %805 = vmatpush1.msra.mxu0 %v766
        %806 = vmatprep.subr.mxu0 0.0
        %807 = vmatpush2.msra.mxu0 0.0
        %808 = vmatprep.subr.mxu0 0.0
        %809 = vmatpush2.msra.mxu0 0.0
        %810 = vmatprep.subr.mxu0 0.0
        %811 = vmatpush2.msra.mxu0 0.0
        %812 = vmatprep.subr.mxu0 0.0
        %813 = vmatpush2.msra.mxu0 0.0
        %814 = vmatprep.subr.mxu0 0.0
        %815 = vmatpush2.msra.mxu0 0.0
        %816 = vmatprep.subr.mxu0 0.0
        %817 = vmatpush2.msra.mxu0 0.0
        %818 = vmatprep.subr.mxu0 0.0
        %819 = vmatpush2.msra.mxu0 0.0
        %820 = vmatprep.subr.mxu0 0.0
        %821 = vmatpush2.msra.mxu0 0.0
        %822 = vmatprep.subr.mxu0 0.0
        %823 = vmatpush2.msra.mxu0 0.0
        %824 = vmatprep.subr.mxu0 0.0
        %825 = vmatpush2.msra.mxu0 0.0
        %826 = vmatprep.subr.mxu0 0.0
        %827 = vmatpush2.msra.mxu0 0.0
        %828 = vmatprep.subr.mxu0 0.0
        %829 = vmatpush2.msra.mxu0 0.0
        %830 = vmatprep.subr.mxu0 0.0
        %831 = vmatpush2.msra.mxu0 0.0
        %832 = vmatprep.subr.mxu0 0.0
        %833 = vmatpush2.msra.mxu0 0.0
        %834 = vmatprep.subr.mxu0 0.0
        %835 = vmatpush2.msra.mxu0 0.0
        %836 = vmatprep.subr.mxu0 0.0
        %837 = vmatpush2.msra.mxu0 0.0
        %838 = vmatprep.mubr.f32.mxu0 0.0
        %839 = vmatmul.mubr.f32.gmra.mxu0 %v599
        %v840 = vpop.f32.mrf.mxu0
        %v841 = vadd.f32 0.0, %v840
        %v842 = vpop.f32.mrf.mxu0
        %843 = vdwg.mxu0
        %v844 = vsub.f32 0.0, %v841
        %846 = vrot.lane.b32.xlu0 %v844, 92
        %v847 = vpop.permute.xlu0 %846
        %850 = vrot.lane.b32.xlu0 %v841, 100
        %v851 = vpop.permute.xlu0 %850
        %vm853 = vcmask 31744
        %v854 = vsel %vm853, %v847, %v851
        %856 = vrot.lane.b32.xlu0 %v569, 32
        %v857 = vpop.permute.xlu0 %856
        %v859 = vmul.f32 %v841, %v857
        %v860 = vmul.f32 %v854, %v570
        %862 = vrot.lane.b32.xlu0 %v860, 32
        %v863 = vpop.permute.xlu0 %862
        %v865 = vadd.f32 %v859, %v863
        %v866 = vld [vmem:[%s9] sm:$0x1]
        %v867 = vmul.f32 %v841, %v841
        %v868 = vsel %vm673, %v867, 0.0
        %869 = vadd.xlane.f32.xlu0 %v868
        %v870 = vpop.xlane.xlu0 %869
        %v871 = vmul.f32 %v870, %v677
        %v872 = vadd.f32 %v871, 1e-06
        %v873 = vrsqrt.pop %v872
        %v874 = vmul.f32 %v841, %v873
        %v876 = vlaneseq
        %v877 = vshrl.u32 %v876, 7
        %v878 = vsub.s32 0, %v877
        %v879 = vrot.slane %v866, %v878
        %v881 = vmul.f32 %v874, %v879
        %v882 = vld [vmem:[%s10] sm:$0xff]
        %v883 = vld [vmem:[%s10 + $0x8] sm:$0xff]
        %v884 = vld [vmem:[%s10 + $0x10] sm:$0xff]
        %v885 = vld [vmem:[%s10 + $0x18] sm:$0xff]
        %v887 = vsel %vm673, %v881, 0
        %889 = vmatprep.subr.mxu0 0.0
        %890 = vmatpush1.msra.mxu0 0.0
        %891 = vmatprep.subr.mxu0 0.0
        %892 = vmatpush1.msra.mxu0 0.0
        %893 = vmatprep.subr.mxu0 0.0
        %894 = vmatpush1.msra.mxu0 0.0
        %895 = vmatprep.subr.mxu0 0.0
        %896 = vmatpush1.msra.mxu0 0.0
        %897 = vmatprep.subr.mxu0 0.0
        %898 = vmatpush1.msra.mxu0 0.0
        %899 = vmatprep.subr.mxu0 0.0
        %900 = vmatpush1.msra.mxu0 0.0
        %901 = vmatprep.subr.mxu0 0.0
        %902 = vmatpush1.msra.mxu0 0.0
        %903 = vmatprep.subr.mxu0 0.0
        %904 = vmatpush1.msra.mxu0 0.0
        %905 = vmatprep.subr.mxu0 0.0
        %906 = vmatpush1.msra.mxu0 0.0
        %907 = vmatprep.subr.mxu0 0.0
        %908 = vmatpush1.msra.mxu0 0.0
        %909 = vmatprep.subr.mxu0 0.0
        %910 = vmatpush1.msra.mxu0 0.0
        %911 = vmatprep.subr.mxu0 0.0
        %912 = vmatpush1.msra.mxu0 0.0
        %913 = vmatprep.subr.mxu0 0.0
        %914 = vmatpush1.msra.mxu0 %v885
        %915 = vmatprep.subr.mxu0 0.0
        %916 = vmatpush1.msra.mxu0 %v884
        %917 = vmatprep.subr.mxu0 0.0
        %918 = vmatpush1.msra.mxu0 %v883
        %919 = vmatprep.subr.mxu0 0.0
        %920 = vmatpush1.msra.mxu0 %v882
        %921 = vmatprep.subr.mxu0 0.0
        %922 = vmatpush2.msra.mxu0 0.0
        %923 = vmatprep.subr.mxu0 0.0
        %924 = vmatpush2.msra.mxu0 0.0
        %925 = vmatprep.subr.mxu0 0.0
        %926 = vmatpush2.msra.mxu0 0.0
        %927 = vmatprep.subr.mxu0 0.0
        %928 = vmatpush2.msra.mxu0 0.0
        %929 = vmatprep.subr.mxu0 0.0
        %930 = vmatpush2.msra.mxu0 0.0
        %931 = vmatprep.subr.mxu0 0.0
        %932 = vmatpush2.msra.mxu0 0.0
        %933 = vmatprep.subr.mxu0 0.0
        %934 = vmatpush2.msra.mxu0 0.0
        %935 = vmatprep.subr.mxu0 0.0
        %936 = vmatpush2.msra.mxu0 0.0
        %937 = vmatprep.subr.mxu0 0.0
        %938 = vmatpush2.msra.mxu0 0.0
        %939 = vmatprep.subr.mxu0 0.0
        %940 = vmatpush2.msra.mxu0 0.0
        %941 = vmatprep.subr.mxu0 0.0
        %942 = vmatpush2.msra.mxu0 0.0
        %943 = vmatprep.subr.mxu0 0.0
        %944 = vmatpush2.msra.mxu0 0.0
        %945 = vmatprep.subr.mxu0 0.0
        %946 = vmatpush2.msra.mxu0 0.0
        %947 = vmatprep.subr.mxu0 0.0
        %948 = vmatpush2.msra.mxu0 0.0
        %949 = vmatprep.subr.mxu0 0.0
        %950 = vmatpush2.msra.mxu0 0.0
        %951 = vmatprep.subr.mxu0 0.0
        %952 = vmatpush2.msra.mxu0 0.0
        %953 = vmatprep.mubr.f32.mxu0 0.0
        %954 = vmatmul.mubr.f32.gmra.mxu0 %v887
        %v955 = vpop.f32.mrf.mxu0
        %v956 = vadd.f32 0.0, %v955
        %v957 = vpop.f32.mrf.mxu0
        %958 = vdwg.mxu0
        %v959 = vsub.f32 0.0, %v763
        %961 = vrot.lane.b32.xlu0 %v959, 108
        %v962 = vpop.permute.xlu0 %961
        %965 = vrot.lane.b32.xlu0 %v763, 116
        %v966 = vpop.permute.xlu0 %965
        %v968 = vsel %vm853, %v962, %v966
        %969 = vrot.lane.b32.xlu0 %v569, 16
        %v970 = vpop.permute.xlu0 %969
        %v972 = vmul.f32 %v763, %v970
        %v973 = vmul.f32 %v968, %v570
        %975 = vrot.lane.b32.xlu0 %v973, 16
        %v976 = vpop.permute.xlu0 %975
        %v978 = vadd.f32 %v972, %v976
        %vm979 = vcmask 130048
        %v980 = vsel %vm979, %v763, %v978
        %982 = vrot.lane.b32.xlu0 %v865, 112
        %v983 = vpop.permute.xlu0 %982
        %v985 = vsel %vm979, %v956, %v983
        %986 = vrot.lane.b32.xlu0 %v959, 84
        %v987 = vpop.permute.xlu0 %986
        %989 = vrot.lane.b32.xlu0 %v763, 92
        %v990 = vpop.permute.xlu0 %989
        %v992 = vsel %vm853, %v987, %v990
        %993 = vrot.lane.b32.xlu0 %v569, 40
        %v994 = vpop.permute.xlu0 %993
        %v996 = vmul.f32 %v763, %v994
        %v997 = vmul.f32 %v992, %v570
        %999 = vrot.lane.b32.xlu0 %v997, 40
        %v1000 = vpop.permute.xlu0 %999
        %v1002 = vadd.f32 %v996, %v1000
        %1003 = vrot.lane.b32.xlu0 %v763, 104
        %v1004 = vpop.permute.xlu0 %1003
        %1007 = vrot.lane.b32.xlu0 %v1002, 104
        %v1008 = vpop.permute.xlu0 %1007
        %v1010 = vsel %vm979, %v1004, %v1008
        %1012 = vrot.lane.b32.xlu0 %v956, 96
        %v1013 = vpop.permute.xlu0 %1012
        %v1015 = vsel %vm979, %v1013, %v983
        %1016 = vrot.lane.b32.xlu0 %v959, 60
        %v1017 = vpop.permute.xlu0 %1016
        %1019 = vrot.lane.b32.xlu0 %v763, 68
        %v1020 = vpop.permute.xlu0 %1019
        %v1022 = vsel %vm853, %v1017, %v1020
        %1023 = vrot.lane.b32.xlu0 %v569, 64
        %v1024 = vpop.permute.xlu0 %1023
        %v1026 = vmul.f32 %v763, %v1024
        %v1027 = vmul.f32 %v1022, %v570
        %1029 = vrot.lane.b32.xlu0 %v1027, 64
        %v1030 = vpop.permute.xlu0 %1029
        %v1032 = vadd.f32 %v1026, %v1030
        %1033 = vrot.lane.b32.xlu0 %v763, 80
        %v1034 = vpop.permute.xlu0 %1033
        %1037 = vrot.lane.b32.xlu0 %v1032, 80
        %v1038 = vpop.permute.xlu0 %1037
        %v1040 = vsel %vm979, %v1034, %v1038
        %1041 = vrot.lane.b32.xlu0 %v956, 64
        %v1042 = vpop.permute.xlu0 %1041
        %v1044 = vsel %vm979, %v1042, %v983
        %1045 = vrot.lane.b32.xlu0 %v959, 36
        %v1046 = vpop.permute.xlu0 %1045
        %1048 = vrot.lane.b32.xlu0 %v763, 44
        %v1049 = vpop.permute.xlu0 %1048
        %v1051 = vsel %vm853, %v1046, %v1049
        %1052 = vrot.lane.b32.xlu0 %v569, 88
        %v1053 = vpop.permute.xlu0 %1052
        %v1055 = vmul.f32 %v763, %v1053
        %v1056 = vmul.f32 %v1051, %v570
        %1058 = vrot.lane.b32.xlu0 %v1056, 88
        %v1059 = vpop.permute.xlu0 %1058
        %v1061 = vadd.f32 %v1055, %v1059
        %1062 = vrot.lane.b32.xlu0 %v763, 56
        %v1063 = vpop.permute.xlu0 %1062
        %1066 = vrot.lane.b32.xlu0 %v1061, 56
        %v1067 = vpop.permute.xlu0 %1066
        %v1069 = vsel %vm979, %v1063, %v1067
        %1070 = vrot.lane.b32.xlu0 %v956, 32
        %v1071 = vpop.permute.xlu0 %1070
        %v1073 = vsel %vm979, %v1071, %v983
        %vm1074 = vcmask 195584
        %v1076 = vsel %vm1074, %v980, 0
        %v1079 = vsel %vm1074, %v985, 0
        %1081 = vmatprep.subr.mxu0 0.0
        %1082 = vmatpush1.xpose.msra.mxu0 0.0
        %1083 = vmatprep.subr.mxu0 0.0
        %1084 = vmatpush1.xpose.msra.mxu0 0.0
        %1085 = vmatprep.subr.mxu0 0.0
        %1086 = vmatpush1.xpose.msra.mxu0 0.0
        %1087 = vmatprep.subr.mxu0 0.0
        %1088 = vmatpush1.xpose.msra.mxu0 0.0
        %1089 = vmatprep.subr.mxu0 0.0
        %1090 = vmatpush1.xpose.msra.mxu0 0.0
        %1091 = vmatprep.subr.mxu0 0.0
        %1092 = vmatpush1.xpose.msra.mxu0 0.0
        %1093 = vmatprep.subr.mxu0 0.0
        %1094 = vmatpush1.xpose.msra.mxu0 0.0
        %1095 = vmatprep.subr.mxu0 0.0
        %1096 = vmatpush1.xpose.msra.mxu0 0.0
        %1097 = vmatprep.subr.mxu0 0.0
        %1098 = vmatpush1.xpose.msra.mxu0 0.0
        %1099 = vmatprep.subr.mxu0 0.0
        %1100 = vmatpush1.xpose.msra.mxu0 0.0
        %1101 = vmatprep.subr.mxu0 0.0
        %1102 = vmatpush1.xpose.msra.mxu0 0.0
        %1103 = vmatprep.subr.mxu0 0.0
        %1104 = vmatpush1.xpose.msra.mxu0 0.0
        %1105 = vmatprep.subr.mxu0 0.0
        %1106 = vmatpush1.xpose.msra.mxu0 0.0
        %1107 = vmatprep.subr.mxu0 0.0
        %1108 = vmatpush1.xpose.msra.mxu0 0.0
        %1109 = vmatprep.subr.mxu0 0.0
        %1110 = vmatpush1.xpose.msra.mxu0 0.0
        %1111 = vmatprep.subr.mxu0 0.0
        %1112 = vmatpush1.xpose.msra.mxu0 %v1079
        %1113 = vmatprep.subr.mxu0 0.0
        %1114 = vmatpush2.xpose.msra.mxu0 0.0
        %1115 = vmatprep.subr.mxu0 0.0
        %1116 = vmatpush2.xpose.msra.mxu0 0.0
        %1117 = vmatprep.subr.mxu0 0.0
        %1118 = vmatpush2.xpose.msra.mxu0 0.0
        %1119 = vmatprep.subr.mxu0 0.0
        %1120 = vmatpush2.xpose.msra.mxu0 0.0
        %1121 = vmatprep.subr.mxu0 0.0
        %1122 = vmatpush2.xpose.msra.mxu0 0.0
        %1123 = vmatprep.subr.mxu0 0.0
        %1124 = vmatpush2.xpose.msra.mxu0 0.0
        %1125 = vmatprep.subr.mxu0 0.0
        %1126 = vmatpush2.xpose.msra.mxu0 0.0
        %1127 = vmatprep.subr.mxu0 0.0
        %1128 = vmatpush2.xpose.msra.mxu0 0.0
        %1129 = vmatprep.subr.mxu0 0.0
        %1130 = vmatpush2.xpose.msra.mxu0 0.0
        %1131 = vmatprep.subr.mxu0 0.0
        %1132 = vmatpush2.xpose.msra.mxu0 0.0
        %1133 = vmatprep.subr.mxu0 0.0
        %1134 = vmatpush2.xpose.msra.mxu0 0.0
        %1135 = vmatprep.subr.mxu0 0.0
        %1136 = vmatpush2.xpose.msra.mxu0 0.0
        %1137 = vmatprep.subr.mxu0 0.0
        %1138 = vmatpush2.xpose.msra.mxu0 0.0
        %1139 = vmatprep.subr.mxu0 0.0
        %1140 = vmatpush2.xpose.msra.mxu0 0.0
        %1141 = vmatprep.subr.mxu0 0.0
        %1142 = vmatpush2.xpose.msra.mxu0 0.0
        %1143 = vmatprep.subr.mxu0 0.0
        %1144 = vmatpush2.xpose.msra.mxu0 0.0
        %1145 = vmatprep.mubr.f32.mxu0 0.0
        %1146 = vmatmul.mubr.f32.gmra.mxu0 %v1076
        %v1147 = vpop.f32.mrf.mxu0
        %v1148 = vadd.f32 0.0, %v1147
        %v1149 = vpop.f32.mrf.mxu0
        %1150 = vdwg.mxu0
        %v1152 = vsel %vm1074, %v1010, 0
        %v1155 = vsel %vm1074, %v1015, 0
        %1157 = vmatprep.subr.mxu0 0.0
        %1158 = vmatpush1.xpose.msra.mxu0 0.0
        %1159 = vmatprep.subr.mxu0 0.0
        %1160 = vmatpush1.xpose.msra.mxu0 0.0
        %1161 = vmatprep.subr.mxu0 0.0
        %1162 = vmatpush1.xpose.msra.mxu0 0.0
        %1163 = vmatprep.subr.mxu0 0.0
        %1164 = vmatpush1.xpose.msra.mxu0 0.0
        %1165 = vmatprep.subr.mxu0 0.0
        %1166 = vmatpush1.xpose.msra.mxu0 0.0
        %1167 = vmatprep.subr.mxu0 0.0
        %1168 = vmatpush1.xpose.msra.mxu0 0.0
        %1169 = vmatprep.subr.mxu0 0.0
        %1170 = vmatpush1.xpose.msra.mxu0 0.0
        %1171 = vmatprep.subr.mxu0 0.0
        %1172 = vmatpush1.xpose.msra.mxu0 0.0
        %1173 = vmatprep.subr.mxu0 0.0
        %1174 = vmatpush1.xpose.msra.mxu0 0.0
        %1175 = vmatprep.subr.mxu0 0.0
        %1176 = vmatpush1.xpose.msra.mxu0 0.0
        %1177 = vmatprep.subr.mxu0 0.0
        %1178 = vmatpush1.xpose.msra.mxu0 0.0
        %1179 = vmatprep.subr.mxu0 0.0
        %1180 = vmatpush1.xpose.msra.mxu0 0.0
        %1181 = vmatprep.subr.mxu0 0.0
        %1182 = vmatpush1.xpose.msra.mxu0 0.0
        %1183 = vmatprep.subr.mxu0 0.0
        %1184 = vmatpush1.xpose.msra.mxu0 0.0
        %1185 = vmatprep.subr.mxu0 0.0
        %1186 = vmatpush1.xpose.msra.mxu0 0.0
        %1187 = vmatprep.subr.mxu0 0.0
        %1188 = vmatpush1.xpose.msra.mxu0 %v1155
        %1189 = vmatprep.subr.mxu0 0.0
        %1190 = vmatpush2.xpose.msra.mxu0 0.0
        %1191 = vmatprep.subr.mxu0 0.0
        %1192 = vmatpush2.xpose.msra.mxu0 0.0
        %1193 = vmatprep.subr.mxu0 0.0
        %1194 = vmatpush2.xpose.msra.mxu0 0.0
        %1195 = vmatprep.subr.mxu0 0.0
        %1196 = vmatpush2.xpose.msra.mxu0 0.0
        %1197 = vmatprep.subr.mxu0 0.0
        %1198 = vmatpush2.xpose.msra.mxu0 0.0
        %1199 = vmatprep.subr.mxu0 0.0
        %1200 = vmatpush2.xpose.msra.mxu0 0.0
        %1201 = vmatprep.subr.mxu0 0.0
        %1202 = vmatpush2.xpose.msra.mxu0 0.0
        %1203 = vmatprep.subr.mxu0 0.0
        %1204 = vmatpush2.xpose.msra.mxu0 0.0
        %1205 = vmatprep.subr.mxu0 0.0
        %1206 = vmatpush2.xpose.msra.mxu0 0.0
        %1207 = vmatprep.subr.mxu0 0.0
        %1208 = vmatpush2.xpose.msra.mxu0 0.0
        %1209 = vmatprep.subr.mxu0 0.0
        %1210 = vmatpush2.xpose.msra.mxu0 0.0
        %1211 = vmatprep.subr.mxu0 0.0
        %1212 = vmatpush2.xpose.msra.mxu0 0.0
        %1213 = vmatprep.subr.mxu0 0.0
        %1214 = vmatpush2.xpose.msra.mxu0 0.0
        %1215 = vmatprep.subr.mxu0 0.0
        %1216 = vmatpush2.xpose.msra.mxu0 0.0
        %1217 = vmatprep.subr.mxu0 0.0
        %1218 = vmatpush2.xpose.msra.mxu0 0.0
        %1219 = vmatprep.subr.mxu0 0.0
        %1220 = vmatpush2.xpose.msra.mxu0 0.0
        %1221 = vmatprep.mubr.f32.mxu0 0.0
        %1222 = vmatmul.mubr.f32.gmra.mxu0 %v1152
        %v1223 = vpop.f32.mrf.mxu0
        %v1224 = vadd.f32 0.0, %v1223
        %v1225 = vpop.f32.mrf.mxu0
        %1226 = vdwg.mxu0
        %v1228 = vsel %vm1074, %v1040, 0
        %v1231 = vsel %vm1074, %v1044, 0
        %1233 = vmatprep.subr.mxu0 0.0
        %1234 = vmatpush1.xpose.msra.mxu0 0.0
        %1235 = vmatprep.subr.mxu0 0.0
        %1236 = vmatpush1.xpose.msra.mxu0 0.0
        %1237 = vmatprep.subr.mxu0 0.0
        %1238 = vmatpush1.xpose.msra.mxu0 0.0
        %1239 = vmatprep.subr.mxu0 0.0
        %1240 = vmatpush1.xpose.msra.mxu0 0.0
        %1241 = vmatprep.subr.mxu0 0.0
        %1242 = vmatpush1.xpose.msra.mxu0 0.0
        %1243 = vmatprep.subr.mxu0 0.0
        %1244 = vmatpush1.xpose.msra.mxu0 0.0
        %1245 = vmatprep.subr.mxu0 0.0
        %1246 = vmatpush1.xpose.msra.mxu0 0.0
        %1247 = vmatprep.subr.mxu0 0.0
        %1248 = vmatpush1.xpose.msra.mxu0 0.0
        %1249 = vmatprep.subr.mxu0 0.0
        %1250 = vmatpush1.xpose.msra.mxu0 0.0
        %1251 = vmatprep.subr.mxu0 0.0
        %1252 = vmatpush1.xpose.msra.mxu0 0.0
        %1253 = vmatprep.subr.mxu0 0.0
        %1254 = vmatpush1.xpose.msra.mxu0 0.0
        %1255 = vmatprep.subr.mxu0 0.0
        %1256 = vmatpush1.xpose.msra.mxu0 0.0
        %1257 = vmatprep.subr.mxu0 0.0
        %1258 = vmatpush1.xpose.msra.mxu0 0.0
        %1259 = vmatprep.subr.mxu0 0.0
        %1260 = vmatpush1.xpose.msra.mxu0 0.0
        %1261 = vmatprep.subr.mxu0 0.0
        %1262 = vmatpush1.xpose.msra.mxu0 0.0
        %1263 = vmatprep.subr.mxu0 0.0
        %1264 = vmatpush1.xpose.msra.mxu0 %v1231
        %1265 = vmatprep.subr.mxu0 0.0
        %1266 = vmatpush2.xpose.msra.mxu0 0.0
        %1267 = vmatprep.subr.mxu0 0.0
        %1268 = vmatpush2.xpose.msra.mxu0 0.0
        %1269 = vmatprep.subr.mxu0 0.0
        %1270 = vmatpush2.xpose.msra.mxu0 0.0
        %1271 = vmatprep.subr.mxu0 0.0
        %1272 = vmatpush2.xpose.msra.mxu0 0.0
        %1273 = vmatprep.subr.mxu0 0.0
        %1274 = vmatpush2.xpose.msra.mxu0 0.0
        %1275 = vmatprep.subr.mxu0 0.0
        %1276 = vmatpush2.xpose.msra.mxu0 0.0
        %1277 = vmatprep.subr.mxu0 0.0
        %1278 = vmatpush2.xpose.msra.mxu0 0.0
        %1279 = vmatprep.subr.mxu0 0.0
        %1280 = vmatpush2.xpose.msra.mxu0 0.0
        %1281 = vmatprep.subr.mxu0 0.0
        %1282 = vmatpush2.xpose.msra.mxu0 0.0
        %1283 = vmatprep.subr.mxu0 0.0
        %1284 = vmatpush2.xpose.msra.mxu0 0.0
        %1285 = vmatprep.subr.mxu0 0.0
        %1286 = vmatpush2.xpose.msra.mxu0 0.0
        %1287 = vmatprep.subr.mxu0 0.0
        %1288 = vmatpush2.xpose.msra.mxu0 0.0
        %1289 = vmatprep.subr.mxu0 0.0
        %1290 = vmatpush2.xpose.msra.mxu0 0.0
        %1291 = vmatprep.subr.mxu0 0.0
        %1292 = vmatpush2.xpose.msra.mxu0 0.0
        %1293 = vmatprep.subr.mxu0 0.0
        %1294 = vmatpush2.xpose.msra.mxu0 0.0
        %1295 = vmatprep.subr.mxu0 0.0
        %1296 = vmatpush2.xpose.msra.mxu0 0.0
        %1297 = vmatprep.mubr.f32.mxu0 0.0
        %1298 = vmatmul.mubr.f32.gmra.mxu0 %v1228
        %v1299 = vpop.f32.mrf.mxu0
        %v1300 = vadd.f32 0.0, %v1299
        %v1301 = vpop.f32.mrf.mxu0
        %1302 = vdwg.mxu0
        %v1304 = vsel %vm1074, %v1069, 0
        %v1307 = vsel %vm1074, %v1073, 0
        %1309 = vmatprep.subr.mxu0 0.0
        %1310 = vmatpush1.xpose.msra.mxu0 0.0
        %1311 = vmatprep.subr.mxu0 0.0
        %1312 = vmatpush1.xpose.msra.mxu0 0.0
        %1313 = vmatprep.subr.mxu0 0.0
        %1314 = vmatpush1.xpose.msra.mxu0 0.0
        %1315 = vmatprep.subr.mxu0 0.0
        %1316 = vmatpush1.xpose.msra.mxu0 0.0
        %1317 = vmatprep.subr.mxu0 0.0
        %1318 = vmatpush1.xpose.msra.mxu0 0.0
        %1319 = vmatprep.subr.mxu0 0.0
        %1320 = vmatpush1.xpose.msra.mxu0 0.0
        %1321 = vmatprep.subr.mxu0 0.0
        %1322 = vmatpush1.xpose.msra.mxu0 0.0
        %1323 = vmatprep.subr.mxu0 0.0
        %1324 = vmatpush1.xpose.msra.mxu0 0.0
        %1325 = vmatprep.subr.mxu0 0.0
        %1326 = vmatpush1.xpose.msra.mxu0 0.0
        %1327 = vmatprep.subr.mxu0 0.0
        %1328 = vmatpush1.xpose.msra.mxu0 0.0
        %1329 = vmatprep.subr.mxu0 0.0
        %1330 = vmatpush1.xpose.msra.mxu0 0.0
        %1331 = vmatprep.subr.mxu0 0.0
        %1332 = vmatpush1.xpose.msra.mxu0 0.0
        %1333 = vmatprep.subr.mxu0 0.0
        %1334 = vmatpush1.xpose.msra.mxu0 0.0
        %1335 = vmatprep.subr.mxu0 0.0
        %1336 = vmatpush1.xpose.msra.mxu0 0.0
        %1337 = vmatprep.subr.mxu0 0.0
        %1338 = vmatpush1.xpose.msra.mxu0 0.0
        %1339 = vmatprep.subr.mxu0 0.0
        %1340 = vmatpush1.xpose.msra.mxu0 %v1307
        %1341 = vmatprep.subr.mxu0 0.0
        %1342 = vmatpush2.xpose.msra.mxu0 0.0
        %1343 = vmatprep.subr.mxu0 0.0
        %1344 = vmatpush2.xpose.msra.mxu0 0.0
        %1345 = vmatprep.subr.mxu0 0.0
        %1346 = vmatpush2.xpose.msra.mxu0 0.0
        %1347 = vmatprep.subr.mxu0 0.0
        %1348 = vmatpush2.xpose.msra.mxu0 0.0
        %1349 = vmatprep.subr.mxu0 0.0
        %1350 = vmatpush2.xpose.msra.mxu0 0.0
        %1351 = vmatprep.subr.mxu0 0.0
        %1352 = vmatpush2.xpose.msra.mxu0 0.0
        %1353 = vmatprep.subr.mxu0 0.0
        %1354 = vmatpush2.xpose.msra.mxu0 0.0
        %1355 = vmatprep.subr.mxu0 0.0
        %1356 = vmatpush2.xpose.msra.mxu0 0.0
        %1357 = vmatprep.subr.mxu0 0.0
        %1358 = vmatpush2.xpose.msra.mxu0 0.0
        %1359 = vmatprep.subr.mxu0 0.0
        %1360 = vmatpush2.xpose.msra.mxu0 0.0
        %1361 = vmatprep.subr.mxu0 0.0
        %1362 = vmatpush2.xpose.msra.mxu0 0.0
        %1363 = vmatprep.subr.mxu0 0.0
        %1364 = vmatpush2.xpose.msra.mxu0 0.0
        %1365 = vmatprep.subr.mxu0 0.0
        %1366 = vmatpush2.xpose.msra.mxu0 0.0
        %1367 = vmatprep.subr.mxu0 0.0
        %1368 = vmatpush2.xpose.msra.mxu0 0.0
        %1369 = vmatprep.subr.mxu0 0.0
        %1370 = vmatpush2.xpose.msra.mxu0 0.0
        %1371 = vmatprep.subr.mxu0 0.0
        %1372 = vmatpush2.xpose.msra.mxu0 0.0
        %1373 = vmatprep.mubr.f32.mxu0 0.0
        %1374 = vmatmul.mubr.f32.gmra.mxu0 %v1304
        %v1375 = vpop.f32.mrf.mxu0
        %v1376 = vadd.f32 0.0, %v1375
        %v1377 = vpop.f32.mrf.mxu0
        %1378 = vdwg.mxu0
        %v1379 = vmul.f32 %v1148, 0.20412415
        %v1380 = vmul.f32 %v1224, 0.20412415
        %v1381 = vmul.f32 %v1300, 0.20412415
        %v1382 = vmul.f32 %v1376, 0.20412415
        %v1383 = vadd.f32 %v1379, %v571
        %v1384 = vadd.f32 %v1380, %v571
        %v1385 = vadd.f32 %v1381, %v571
        %v1386 = vadd.f32 %v1382, %v571
        %vm1387 = vcmask 64512
        %v1388 = vsel %vm1387, %v1383, -inf
        %1389 = vmax.xlane.f32.xlu0 %v1388
        %v1390 = vpop.xlane.xlu0 %1389
        %v1391 = vsel %vm1387, %v1384, -inf
        %1392 = vmax.xlane.f32.xlu0 %v1391
        %v1393 = vpop.xlane.xlu0 %1392
        %v1394 = vsel %vm1387, %v1385, -inf
        %1395 = vmax.xlane.f32.xlu0 %v1394
        %v1396 = vpop.xlane.xlu0 %1395
        %v1397 = vsel %vm1387, %v1386, -inf
        %1398 = vmax.xlane.f32.xlu0 %v1397
        %v1399 = vpop.xlane.xlu0 %1398
        %v1400 = vsub.f32 %v1383, %v1390
        %v1401 = vsub.f32 %v1384, %v1393
        %v1402 = vsub.f32 %v1385, %v1396
        %v1403 = vsub.f32 %v1386, %v1399
        %v1404 = vmul.f32 %v1400, 1.442695
        %v1405 = vpow.pop %v1404
        %v1406 = vmul.f32 %v1401, 1.442695
        %v1407 = vpow.pop %v1406
        %v1408 = vmul.f32 %v1402, 1.442695
        %v1409 = vpow.pop %v1408
        %v1410 = vmul.f32 %v1403, 1.442695
        %v1411 = vpow.pop %v1410
        %v1412 = vsel %vm1387, %v1405, 0.0
        %1413 = vadd.xlane.f32.xlu0 %v1412
        %v1414 = vpop.xlane.xlu0 %1413
        %v1415 = vsel %vm1387, %v1407, 0.0
        %1416 = vadd.xlane.f32.xlu0 %v1415
        %v1417 = vpop.xlane.xlu0 %1416
        %v1418 = vsel %vm1387, %v1409, 0.0
        %1419 = vadd.xlane.f32.xlu0 %v1418
        %v1420 = vpop.xlane.xlu0 %1419
        %v1421 = vsel %vm1387, %v1411, 0.0
        %1422 = vadd.xlane.f32.xlu0 %v1421
        %v1423 = vpop.xlane.xlu0 %1422
        %v1424 = vrcp.pop %v1414
        %v1425 = vrcp.pop %v1417
        %v1426 = vrcp.pop %v1420
        %v1427 = vrcp.pop %v1423
        %v1428 = vmul.f32 %v1405, %v1424
        %v1429 = vmul.f32 %v1407, %v1425
        %v1430 = vmul.f32 %v1409, %v1426
        %v1431 = vmul.f32 %v1411, %v1427
        %1432 = vrot.lane.b32.xlu0 %v956, 112
        %v1433 = vpop.permute.xlu0 %1432
        %v1436 = vsel %vm1387, %v1428, 0
        %1438 = vmatprep.subr.mxu0 0.0
        %1439 = vmatpush1.msra.mxu0 0.0
        %1440 = vmatprep.subr.mxu0 0.0
        %1441 = vmatpush1.msra.mxu0 0.0
        %1442 = vmatprep.subr.mxu0 0.0
        %1443 = vmatpush1.msra.mxu0 0.0
        %1444 = vmatprep.subr.mxu0 0.0
        %1445 = vmatpush1.msra.mxu0 0.0
        %1446 = vmatprep.subr.mxu0 0.0
        %1447 = vmatpush1.msra.mxu0 0.0
        %1448 = vmatprep.subr.mxu0 0.0
        %1449 = vmatpush1.msra.mxu0 0.0
        %1450 = vmatprep.subr.mxu0 0.0
        %1451 = vmatpush1.msra.mxu0 0.0
        %1452 = vmatprep.subr.mxu0 0.0
        %1453 = vmatpush1.msra.mxu0 0.0
        %1454 = vmatprep.subr.mxu0 0.0
        %1455 = vmatpush1.msra.mxu0 0.0
        %1456 = vmatprep.subr.mxu0 0.0
        %1457 = vmatpush1.msra.mxu0 0.0
        %1458 = vmatprep.subr.mxu0 0.0
        %1459 = vmatpush1.msra.mxu0 0.0
        %1460 = vmatprep.subr.mxu0 0.0
        %1461 = vmatpush1.msra.mxu0 0.0
        %1462 = vmatprep.subr.mxu0 0.0
        %1463 = vmatpush1.msra.mxu0 0.0
        %1464 = vmatprep.subr.mxu0 0.0
        %1465 = vmatpush1.msra.mxu0 0.0
        %1466 = vmatprep.subr.mxu0 0.0
        %1467 = vmatpush1.msra.mxu0 0.0
        %1468 = vmatprep.subr.mxu0 0.0
        %1469 = vmatpush1.msra.mxu0 %v1433
        %1470 = vmatprep.subr.mxu0 0.0
        %1471 = vmatpush2.msra.mxu0 0.0
        %1472 = vmatprep.subr.mxu0 0.0
        %1473 = vmatpush2.msra.mxu0 0.0
        %1474 = vmatprep.subr.mxu0 0.0
        %1475 = vmatpush2.msra.mxu0 0.0
        %1476 = vmatprep.subr.mxu0 0.0
        %1477 = vmatpush2.msra.mxu0 0.0
        %1478 = vmatprep.subr.mxu0 0.0
        %1479 = vmatpush2.msra.mxu0 0.0
        %1480 = vmatprep.subr.mxu0 0.0
        %1481 = vmatpush2.msra.mxu0 0.0
        %1482 = vmatprep.subr.mxu0 0.0
        %1483 = vmatpush2.msra.mxu0 0.0
        %1484 = vmatprep.subr.mxu0 0.0
        %1485 = vmatpush2.msra.mxu0 0.0
        %1486 = vmatprep.subr.mxu0 0.0
        %1487 = vmatpush2.msra.mxu0 0.0
        %1488 = vmatprep.subr.mxu0 0.0
        %1489 = vmatpush2.msra.mxu0 0.0
        %1490 = vmatprep.subr.mxu0 0.0
        %1491 = vmatpush2.msra.mxu0 0.0
        %1492 = vmatprep.subr.mxu0 0.0
        %1493 = vmatpush2.msra.mxu0 0.0
        %1494 = vmatprep.subr.mxu0 0.0
        %1495 = vmatpush2.msra.mxu0 0.0
        %1496 = vmatprep.subr.mxu0 0.0
        %1497 = vmatpush2.msra.mxu0 0.0
        %1498 = vmatprep.subr.mxu0 0.0
        %1499 = vmatpush2.msra.mxu0 0.0
        %1500 = vmatprep.subr.mxu0 0.0
        %1501 = vmatpush2.msra.mxu0 0.0
        %1502 = vmatprep.mubr.f32.mxu0 0.0
        %1503 = vmatmul.mubr.f32.gmra.mxu0 %v1436
        %v1504 = vpop.f32.mrf.mxu0
        %v1505 = vadd.f32 0.0, %v1504
        %v1506 = vpop.f32.mrf.mxu0
        %1507 = vdwg.mxu0
        %1508 = vrot.lane.b32.xlu0 %v1013, 112
        %v1509 = vpop.permute.xlu0 %1508
        %v1512 = vsel %vm1387, %v1429, 0
        %1514 = vmatprep.subr.mxu0 0.0
        %1515 = vmatpush1.msra.mxu0 0.0
        %1516 = vmatprep.subr.mxu0 0.0
        %1517 = vmatpush1.msra.mxu0 0.0
        %1518 = vmatprep.subr.mxu0 0.0
        %1519 = vmatpush1.msra.mxu0 0.0
        %1520 = vmatprep.subr.mxu0 0.0
        %1521 = vmatpush1.msra.mxu0 0.0
        %1522 = vmatprep.subr.mxu0 0.0
        %1523 = vmatpush1.msra.mxu0 0.0
        %1524 = vmatprep.subr.mxu0 0.0
        %1525 = vmatpush1.msra.mxu0 0.0
        %1526 = vmatprep.subr.mxu0 0.0
        %1527 = vmatpush1.msra.mxu0 0.0
        %1528 = vmatprep.subr.mxu0 0.0
        %1529 = vmatpush1.msra.mxu0 0.0
        %1530 = vmatprep.subr.mxu0 0.0
        %1531 = vmatpush1.msra.mxu0 0.0
        %1532 = vmatprep.subr.mxu0 0.0
        %1533 = vmatpush1.msra.mxu0 0.0
        %1534 = vmatprep.subr.mxu0 0.0
        %1535 = vmatpush1.msra.mxu0 0.0
        %1536 = vmatprep.subr.mxu0 0.0
        %1537 = vmatpush1.msra.mxu0 0.0
        %1538 = vmatprep.subr.mxu0 0.0
        %1539 = vmatpush1.msra.mxu0 0.0
        %1540 = vmatprep.subr.mxu0 0.0
        %1541 = vmatpush1.msra.mxu0 0.0
        %1542 = vmatprep.subr.mxu0 0.0
        %1543 = vmatpush1.msra.mxu0 0.0
        %1544 = vmatprep.subr.mxu0 0.0
        %1545 = vmatpush1.msra.mxu0 %v1509
        %1546 = vmatprep.subr.mxu0 0.0
        %1547 = vmatpush2.msra.mxu0 0.0
        %1548 = vmatprep.subr.mxu0 0.0
        %1549 = vmatpush2.msra.mxu0 0.0
        %1550 = vmatprep.subr.mxu0 0.0
        %1551 = vmatpush2.msra.mxu0 0.0
        %1552 = vmatprep.subr.mxu0 0.0
        %1553 = vmatpush2.msra.mxu0 0.0
        %1554 = vmatprep.subr.mxu0 0.0
        %1555 = vmatpush2.msra.mxu0 0.0
        %1556 = vmatprep.subr.mxu0 0.0
        %1557 = vmatpush2.msra.mxu0 0.0
        %1558 = vmatprep.subr.mxu0 0.0
        %1559 = vmatpush2.msra.mxu0 0.0
        %1560 = vmatprep.subr.mxu0 0.0
        %1561 = vmatpush2.msra.mxu0 0.0
        %1562 = vmatprep.subr.mxu0 0.0
        %1563 = vmatpush2.msra.mxu0 0.0
        %1564 = vmatprep.subr.mxu0 0.0
        %1565 = vmatpush2.msra.mxu0 0.0
        %1566 = vmatprep.subr.mxu0 0.0
        %1567 = vmatpush2.msra.mxu0 0.0
        %1568 = vmatprep.subr.mxu0 0.0
        %1569 = vmatpush2.msra.mxu0 0.0
        %1570 = vmatprep.subr.mxu0 0.0
        %1571 = vmatpush2.msra.mxu0 0.0
        %1572 = vmatprep.subr.mxu0 0.0
        %1573 = vmatpush2.msra.mxu0 0.0
        %1574 = vmatprep.subr.mxu0 0.0
        %1575 = vmatpush2.msra.mxu0 0.0
        %1576 = vmatprep.subr.mxu0 0.0
        %1577 = vmatpush2.msra.mxu0 0.0
        %1578 = vmatprep.mubr.f32.mxu0 0.0
        %1579 = vmatmul.mubr.f32.gmra.mxu0 %v1512
        %v1580 = vpop.f32.mrf.mxu0
        %v1581 = vadd.f32 0.0, %v1580
        %v1582 = vpop.f32.mrf.mxu0
        %1583 = vdwg.mxu0
        %1584 = vrot.lane.b32.xlu0 %v1042, 112
        %v1585 = vpop.permute.xlu0 %1584
        %v1588 = vsel %vm1387, %v1430, 0
        %1590 = vmatprep.subr.mxu0 0.0
        %1591 = vmatpush1.msra.mxu0 0.0
        %1592 = vmatprep.subr.mxu0 0.0
        %1593 = vmatpush1.msra.mxu0 0.0
        %1594 = vmatprep.subr.mxu0 0.0
        %1595 = vmatpush1.msra.mxu0 0.0
        %1596 = vmatprep.subr.mxu0 0.0
        %1597 = vmatpush1.msra.mxu0 0.0
        %1598 = vmatprep.subr.mxu0 0.0
        %1599 = vmatpush1.msra.mxu0 0.0
        %1600 = vmatprep.subr.mxu0 0.0
        %1601 = vmatpush1.msra.mxu0 0.0
        %1602 = vmatprep.subr.mxu0 0.0
        %1603 = vmatpush1.msra.mxu0 0.0
        %1604 = vmatprep.subr.mxu0 0.0
        %1605 = vmatpush1.msra.mxu0 0.0
        %1606 = vmatprep.subr.mxu0 0.0
        %1607 = vmatpush1.msra.mxu0 0.0
        %1608 = vmatprep.subr.mxu0 0.0
        %1609 = vmatpush1.msra.mxu0 0.0
        %1610 = vmatprep.subr.mxu0 0.0
        %1611 = vmatpush1.msra.mxu0 0.0
        %1612 = vmatprep.subr.mxu0 0.0
        %1613 = vmatpush1.msra.mxu0 0.0
        %1614 = vmatprep.subr.mxu0 0.0
        %1615 = vmatpush1.msra.mxu0 0.0
        %1616 = vmatprep.subr.mxu0 0.0
        %1617 = vmatpush1.msra.mxu0 0.0
        %1618 = vmatprep.subr.mxu0 0.0
        %1619 = vmatpush1.msra.mxu0 0.0
        %1620 = vmatprep.subr.mxu0 0.0
        %1621 = vmatpush1.msra.mxu0 %v1585
        %1622 = vmatprep.subr.mxu0 0.0
        %1623 = vmatpush2.msra.mxu0 0.0
        %1624 = vmatprep.subr.mxu0 0.0
        %1625 = vmatpush2.msra.mxu0 0.0
        %1626 = vmatprep.subr.mxu0 0.0
        %1627 = vmatpush2.msra.mxu0 0.0
        %1628 = vmatprep.subr.mxu0 0.0
        %1629 = vmatpush2.msra.mxu0 0.0
        %1630 = vmatprep.subr.mxu0 0.0
        %1631 = vmatpush2.msra.mxu0 0.0
        %1632 = vmatprep.subr.mxu0 0.0
        %1633 = vmatpush2.msra.mxu0 0.0
        %1634 = vmatprep.subr.mxu0 0.0
        %1635 = vmatpush2.msra.mxu0 0.0
        %1636 = vmatprep.subr.mxu0 0.0
        %1637 = vmatpush2.msra.mxu0 0.0
        %1638 = vmatprep.subr.mxu0 0.0
        %1639 = vmatpush2.msra.mxu0 0.0
        %1640 = vmatprep.subr.mxu0 0.0
        %1641 = vmatpush2.msra.mxu0 0.0
        %1642 = vmatprep.subr.mxu0 0.0
        %1643 = vmatpush2.msra.mxu0 0.0
        %1644 = vmatprep.subr.mxu0 0.0
        %1645 = vmatpush2.msra.mxu0 0.0
        %1646 = vmatprep.subr.mxu0 0.0
        %1647 = vmatpush2.msra.mxu0 0.0
        %1648 = vmatprep.subr.mxu0 0.0
        %1649 = vmatpush2.msra.mxu0 0.0
        %1650 = vmatprep.subr.mxu0 0.0
        %1651 = vmatpush2.msra.mxu0 0.0
        %1652 = vmatprep.subr.mxu0 0.0
        %1653 = vmatpush2.msra.mxu0 0.0
        %1654 = vmatprep.mubr.f32.mxu0 0.0
        %1655 = vmatmul.mubr.f32.gmra.mxu0 %v1588
        %v1656 = vpop.f32.mrf.mxu0
        %v1657 = vadd.f32 0.0, %v1656
        %v1658 = vpop.f32.mrf.mxu0
        %1659 = vdwg.mxu0
        %1660 = vrot.lane.b32.xlu0 %v1071, 112
        %v1661 = vpop.permute.xlu0 %1660
        %v1664 = vsel %vm1387, %v1431, 0
        %1666 = vmatprep.subr.mxu0 0.0
        %1667 = vmatpush1.msra.mxu0 0.0
        %1668 = vmatprep.subr.mxu0 0.0
        %1669 = vmatpush1.msra.mxu0 0.0
        %1670 = vmatprep.subr.mxu0 0.0
        %1671 = vmatpush1.msra.mxu0 0.0
        %1672 = vmatprep.subr.mxu0 0.0
        %1673 = vmatpush1.msra.mxu0 0.0
        %1674 = vmatprep.subr.mxu0 0.0
        %1675 = vmatpush1.msra.mxu0 0.0
        %1676 = vmatprep.subr.mxu0 0.0
        %1677 = vmatpush1.msra.mxu0 0.0
        %1678 = vmatprep.subr.mxu0 0.0
        %1679 = vmatpush1.msra.mxu0 0.0
        %1680 = vmatprep.subr.mxu0 0.0
        %1681 = vmatpush1.msra.mxu0 0.0
        %1682 = vmatprep.subr.mxu0 0.0
        %1683 = vmatpush1.msra.mxu0 0.0
        %1684 = vmatprep.subr.mxu0 0.0
        %1685 = vmatpush1.msra.mxu0 0.0
        %1686 = vmatprep.subr.mxu0 0.0
        %1687 = vmatpush1.msra.mxu0 0.0
        %1688 = vmatprep.subr.mxu0 0.0
        %1689 = vmatpush1.msra.mxu0 0.0
        %1690 = vmatprep.subr.mxu0 0.0
        %1691 = vmatpush1.msra.mxu0 0.0
        %1692 = vmatprep.subr.mxu0 0.0
        %1693 = vmatpush1.msra.mxu0 0.0
        %1694 = vmatprep.subr.mxu0 0.0
        %1695 = vmatpush1.msra.mxu0 0.0
        %1696 = vmatprep.subr.mxu0 0.0
        %1697 = vmatpush1.msra.mxu0 %v1661
        %1698 = vmatprep.subr.mxu0 0.0
        %1699 = vmatpush2.msra.mxu0 0.0
        %1700 = vmatprep.subr.mxu0 0.0
        %1701 = vmatpush2.msra.mxu0 0.0
        %1702 = vmatprep.subr.mxu0 0.0
        %1703 = vmatpush2.msra.mxu0 0.0
        %1704 = vmatprep.subr.mxu0 0.0
        %1705 = vmatpush2.msra.mxu0 0.0
        %1706 = vmatprep.subr.mxu0 0.0
        %1707 = vmatpush2.msra.mxu0 0.0
        %1708 = vmatprep.subr.mxu0 0.0
        %1709 = vmatpush2.msra.mxu0 0.0
        %1710 = vmatprep.subr.mxu0 0.0
        %1711 = vmatpush2.msra.mxu0 0.0
        %1712 = vmatprep.subr.mxu0 0.0
        %1713 = vmatpush2.msra.mxu0 0.0
        %1714 = vmatprep.subr.mxu0 0.0
        %1715 = vmatpush2.msra.mxu0 0.0
        %1716 = vmatprep.subr.mxu0 0.0
        %1717 = vmatpush2.msra.mxu0 0.0
        %1718 = vmatprep.subr.mxu0 0.0
        %1719 = vmatpush2.msra.mxu0 0.0
        %1720 = vmatprep.subr.mxu0 0.0
        %1721 = vmatpush2.msra.mxu0 0.0
        %1722 = vmatprep.subr.mxu0 0.0
        %1723 = vmatpush2.msra.mxu0 0.0
        %1724 = vmatprep.subr.mxu0 0.0
        %1725 = vmatpush2.msra.mxu0 0.0
        %1726 = vmatprep.subr.mxu0 0.0
        %1727 = vmatpush2.msra.mxu0 0.0
        %1728 = vmatprep.subr.mxu0 0.0
        %1729 = vmatpush2.msra.mxu0 0.0
        %1730 = vmatprep.mubr.f32.mxu0 0.0
        %1731 = vmatmul.mubr.f32.gmra.mxu0 %v1664
        %v1732 = vpop.f32.mrf.mxu0
        %v1733 = vadd.f32 0.0, %v1732
        %v1734 = vpop.f32.mrf.mxu0
        %1735 = vdwg.mxu0
        %1737 = vrot.lane.b32.xlu0 %v1581, 16
        %v1738 = vpop.permute.xlu0 %1737
        %1741 = vrot.lane.b32.xlu0 %v1657, 32
        %v1742 = vpop.permute.xlu0 %1741
        %1745 = vrot.lane.b32.xlu0 %v1733, 48
        %v1746 = vpop.permute.xlu0 %1745
        %v1748 = vsel %vm979, %v1505, %v1738
        %v1749 = vsel %vm673, %v1748, %v1742
        %vm1750 = vcmask 392192
        %v1751 = vsel %vm1750, %v1749, %v1746
        %v1752 = vld [vmem:[%s11] sm:$0xff]
        %v1753 = vld [vmem:[%s11 + $0x8] sm:$0xff]
        %v1754 = vld [vmem:[%s11 + $0x10] sm:$0xff]
        %v1755 = vld [vmem:[%s11 + $0x18] sm:$0xff]
        %v1756 = vld [vmem:[%s11 + $0x20] sm:$0xff]
        %v1757 = vld [vmem:[%s11 + $0x28] sm:$0xff]
        %v1758 = vld [vmem:[%s11 + $0x30] sm:$0xff]
        %v1759 = vld [vmem:[%s11 + $0x38] sm:$0xff]
        %v1761 = vsel %vm574, %v1751, 0
        %1763 = vmatprep.subr.mxu0 0.0
        %1764 = vmatpush1.msra.mxu0 0.0
        %1765 = vmatprep.subr.mxu0 0.0
        %1766 = vmatpush1.msra.mxu0 0.0
        %1767 = vmatprep.subr.mxu0 0.0
        %1768 = vmatpush1.msra.mxu0 0.0
        %1769 = vmatprep.subr.mxu0 0.0
        %1770 = vmatpush1.msra.mxu0 0.0
        %1771 = vmatprep.subr.mxu0 0.0
        %1772 = vmatpush1.msra.mxu0 0.0
        %1773 = vmatprep.subr.mxu0 0.0
        %1774 = vmatpush1.msra.mxu0 0.0
        %1775 = vmatprep.subr.mxu0 0.0
        %1776 = vmatpush1.msra.mxu0 0.0
        %1777 = vmatprep.subr.mxu0 0.0
        %1778 = vmatpush1.msra.mxu0 0.0
        %1779 = vmatprep.subr.mxu0 0.0
        %1780 = vmatpush1.msra.mxu0 %v1759
        %1781 = vmatprep.subr.mxu0 0.0
        %1782 = vmatpush1.msra.mxu0 %v1758
        %1783 = vmatprep.subr.mxu0 0.0
        %1784 = vmatpush1.msra.mxu0 %v1757
        %1785 = vmatprep.subr.mxu0 0.0
        %1786 = vmatpush1.msra.mxu0 %v1756
        %1787 = vmatprep.subr.mxu0 0.0
        %1788 = vmatpush1.msra.mxu0 %v1755
        %1789 = vmatprep.subr.mxu0 0.0
        %1790 = vmatpush1.msra.mxu0 %v1754
        %1791 = vmatprep.subr.mxu0 0.0
        %1792 = vmatpush1.msra.mxu0 %v1753
        %1793 = vmatprep.subr.mxu0 0.0
        %1794 = vmatpush1.msra.mxu0 %v1752
        %1795 = vmatprep.subr.mxu0 0.0
        %1796 = vmatpush2.msra.mxu0 0.0
        %1797 = vmatprep.subr.mxu0 0.0
        %1798 = vmatpush2.msra.mxu0 0.0
        %1799 = vmatprep.subr.mxu0 0.0
        %1800 = vmatpush2.msra.mxu0 0.0
        %1801 = vmatprep.subr.mxu0 0.0
        %1802 = vmatpush2.msra.mxu0 0.0
        %1803 = vmatprep.subr.mxu0 0.0
        %1804 = vmatpush2.msra.mxu0 0.0
        %1805 = vmatprep.subr.mxu0 0.0
        %1806 = vmatpush2.msra.mxu0 0.0
        %1807 = vmatprep.subr.mxu0 0.0
        %1808 = vmatpush2.msra.mxu0 0.0
        %1809 = vmatprep.subr.mxu0 0.0
        %1810 = vmatpush2.msra.mxu0 0.0
        %1811 = vmatprep.subr.mxu0 0.0
        %1812 = vmatpush2.msra.mxu0 0.0
        %1813 = vmatprep.subr.mxu0 0.0
        %1814 = vmatpush2.msra.mxu0 0.0
        %1815 = vmatprep.subr.mxu0 0.0
        %1816 = vmatpush2.msra.mxu0 0.0
        %1817 = vmatprep.subr.mxu0 0.0
        %1818 = vmatpush2.msra.mxu0 0.0
        %1819 = vmatprep.subr.mxu0 0.0
        %1820 = vmatpush2.msra.mxu0 0.0
        %1821 = vmatprep.subr.mxu0 0.0
        %1822 = vmatpush2.msra.mxu0 0.0
        %1823 = vmatprep.subr.mxu0 0.0
        %1824 = vmatpush2.msra.mxu0 0.0
        %1825 = vmatprep.subr.mxu0 0.0
        %1826 = vmatpush2.msra.mxu0 0.0
        %1827 = vmatprep.mubr.f32.mxu0 0.0
        %1828 = vmatmul.mubr.f32.gmra.mxu0 %v1761
        %v1829 = vpop.f32.mrf.mxu0
        %v1830 = vadd.f32 0.0, %v1829
        %v1831 = vpop.f32.mrf.mxu0
        %1832 = vdwg.mxu0
        %v1833 = vadd.f32 %v568, %v1830
        %v1834 = vld [vmem:[%s12] sm:$0x1]
        %v1835 = vmul.f32 %v1833, %v1833
        %v1836 = vsel %vm574, %v1835, 0.0
        %1837 = vadd.xlane.f32.xlu0 %v1836
        %v1838 = vpop.xlane.xlu0 %1837
        %v1839 = vmul.f32 %v1838, %v578
        %v1840 = vadd.f32 %v1839, 1e-06
        %v1841 = vrsqrt.pop %v1840
        %v1842 = vmul.f32 %v1833, %v1841
        %v1844 = vlaneseq
        %v1845 = vshrl.u32 %v1844, 7
        %v1846 = vsub.s32 0, %v1845
        %v1847 = vrot.slane %v1834, %v1846
        %v1849 = vmul.f32 %v1842, %v1847
        %v1850 = vld [vmem:[%s13] sm:$0xff]
        %v1851 = vld [vmem:[%s13 + $0x8] sm:$0xff]
        %v1852 = vld [vmem:[%s13 + $0x10] sm:$0xff]
        %v1853 = vld [vmem:[%s13 + $0x18] sm:$0xff]
        %v1854 = vld [vmem:[%s13 + $0x20] sm:$0xff]
        %v1855 = vld [vmem:[%s13 + $0x28] sm:$0xff]
        %v1856 = vld [vmem:[%s13 + $0x30] sm:$0xff]
        %v1857 = vld [vmem:[%s13 + $0x38] sm:$0xff]
        %v1859 = vsel %vm574, %v1849, 0
        %1861 = vmatprep.subr.mxu0 0.0
        %1862 = vmatpush1.msra.mxu0 0.0
        %1863 = vmatprep.subr.mxu0 0.0
        %1864 = vmatpush1.msra.mxu0 0.0
        %1865 = vmatprep.subr.mxu0 0.0
        %1866 = vmatpush1.msra.mxu0 0.0
        %1867 = vmatprep.subr.mxu0 0.0
        %1868 = vmatpush1.msra.mxu0 0.0
        %1869 = vmatprep.subr.mxu0 0.0
        %1870 = vmatpush1.msra.mxu0 0.0
        %1871 = vmatprep.subr.mxu0 0.0
        %1872 = vmatpush1.msra.mxu0 0.0
        %1873 = vmatprep.subr.mxu0 0.0
        %1874 = vmatpush1.msra.mxu0 0.0
        %1875 = vmatprep.subr.mxu0 0.0
        %1876 = vmatpush1.msra.mxu0 0.0
        %1877 = vmatprep.subr.mxu0 0.0
        %1878 = vmatpush1.msra.mxu0 %v1857
        %1879 = vmatprep.subr.mxu0 0.0
        %1880 = vmatpush1.msra.mxu0 %v1856
        %1881 = vmatprep.subr.mxu0 0.0
        %1882 = vmatpush1.msra.mxu0 %v1855
        %1883 = vmatprep.subr.mxu0 0.0
        %1884 = vmatpush1.msra.mxu0 %v1854
        %1885 = vmatprep.subr.mxu0 0.0
        %1886 = vmatpush1.msra.mxu0 %v1853
        %1887 = vmatprep.subr.mxu0 0.0
        %1888 = vmatpush1.msra.mxu0 %v1852
        %1889 = vmatprep.subr.mxu0 0.0
        %1890 = vmatpush1.msra.mxu0 %v1851
        %1891 = vmatprep.subr.mxu0 0.0
        %1892 = vmatpush1.msra.mxu0 %v1850
        %1893 = vmatprep.subr.mxu0 0.0
        %1894 = vmatpush2.msra.mxu0 0.0
        %1895 = vmatprep.subr.mxu0 0.0
        %1896 = vmatpush2.msra.mxu0 0.0
        %1897 = vmatprep.subr.mxu0 0.0
        %1898 = vmatpush2.msra.mxu0 0.0
        %1899 = vmatprep.subr.mxu0 0.0
        %1900 = vmatpush2.msra.mxu0 0.0
        %1901 = vmatprep.subr.mxu0 0.0
        %1902 = vmatpush2.msra.mxu0 0.0
        %1903 = vmatprep.subr.mxu0 0.0
        %1904 = vmatpush2.msra.mxu0 0.0
        %1905 = vmatprep.subr.mxu0 0.0
        %1906 = vmatpush2.msra.mxu0 0.0
        %1907 = vmatprep.subr.mxu0 0.0
        %1908 = vmatpush2.msra.mxu0 0.0
        %1909 = vmatprep.subr.mxu0 0.0
        %1910 = vmatpush2.msra.mxu0 0.0
        %1911 = vmatprep.subr.mxu0 0.0
        %1912 = vmatpush2.msra.mxu0 0.0
        %1913 = vmatprep.subr.mxu0 0.0
        %1914 = vmatpush2.msra.mxu0 0.0
        %1915 = vmatprep.subr.mxu0 0.0
        %1916 = vmatpush2.msra.mxu0 0.0
        %1917 = vmatprep.subr.mxu0 0.0
        %1918 = vmatpush2.msra.mxu0 0.0
        %1919 = vmatprep.subr.mxu0 0.0
        %1920 = vmatpush2.msra.mxu0 0.0
        %1921 = vmatprep.subr.mxu0 0.0
        %1922 = vmatpush2.msra.mxu0 0.0
        %1923 = vmatprep.subr.mxu0 0.0
        %1924 = vmatpush2.msra.mxu0 0.0
        %1925 = vmatprep.mubr.f32.mxu0 0.0
        %1926 = vmatmul.mubr.f32.gmra.mxu0 %v1859
        %v1927 = vpop.f32.mrf.mxu0
        %v1928 = vadd.f32 0.0, %v1927
        %v1929 = vpop.f32.mrf.mxu0
        %1930 = vdwg.mxu0
        %v1931 = vld [vmem:[%s14] sm:$0xff]
        %v1932 = vld [vmem:[%s14 + $0x8] sm:$0xff]
        %v1933 = vld [vmem:[%s14 + $0x10] sm:$0xff]
        %v1934 = vld [vmem:[%s14 + $0x18] sm:$0xff]
        %v1935 = vld [vmem:[%s14 + $0x20] sm:$0xff]
        %v1936 = vld [vmem:[%s14 + $0x28] sm:$0xff]
        %v1937 = vld [vmem:[%s14 + $0x30] sm:$0xff]
        %v1938 = vld [vmem:[%s14 + $0x38] sm:$0xff]
        %1939 = vmatprep.subr.mxu0 0.0
        %1940 = vmatpush1.msra.mxu0 0.0
        %1941 = vmatprep.subr.mxu0 0.0
        %1942 = vmatpush1.msra.mxu0 0.0
        %1943 = vmatprep.subr.mxu0 0.0
        %1944 = vmatpush1.msra.mxu0 0.0
        %1945 = vmatprep.subr.mxu0 0.0
        %1946 = vmatpush1.msra.mxu0 0.0
        %1947 = vmatprep.subr.mxu0 0.0
        %1948 = vmatpush1.msra.mxu0 0.0
        %1949 = vmatprep.subr.mxu0 0.0
        %1950 = vmatpush1.msra.mxu0 0.0
        %1951 = vmatprep.subr.mxu0 0.0
        %1952 = vmatpush1.msra.mxu0 0.0
        %1953 = vmatprep.subr.mxu0 0.0
        %1954 = vmatpush1.msra.mxu0 0.0
        %1955 = vmatprep.subr.mxu0 0.0
        %1956 = vmatpush1.msra.mxu0 %v1938
        %1957 = vmatprep.subr.mxu0 0.0
        %1958 = vmatpush1.msra.mxu0 %v1937
        %1959 = vmatprep.subr.mxu0 0.0
        %1960 = vmatpush1.msra.mxu0 %v1936
        %1961 = vmatprep.subr.mxu0 0.0
        %1962 = vmatpush1.msra.mxu0 %v1935
        %1963 = vmatprep.subr.mxu0 0.0
        %1964 = vmatpush1.msra.mxu0 %v1934
        %1965 = vmatprep.subr.mxu0 0.0
        %1966 = vmatpush1.msra.mxu0 %v1933
        %1967 = vmatprep.subr.mxu0 0.0
        %1968 = vmatpush1.msra.mxu0 %v1932
        %1969 = vmatprep.subr.mxu0 0.0
        %1970 = vmatpush1.msra.mxu0 %v1931
        %1971 = vmatprep.subr.mxu0 0.0
        %1972 = vmatpush2.msra.mxu0 0.0
        %1973 = vmatprep.subr.mxu0 0.0
        %1974 = vmatpush2.msra.mxu0 0.0
        %1975 = vmatprep.subr.mxu0 0.0
        %1976 = vmatpush2.msra.mxu0 0.0
        %1977 = vmatprep.subr.mxu0 0.0
        %1978 = vmatpush2.msra.mxu0 0.0
        %1979 = vmatprep.subr.mxu0 0.0
        %1980 = vmatpush2.msra.mxu0 0.0
        %1981 = vmatprep.subr.mxu0 0.0
        %1982 = vmatpush2.msra.mxu0 0.0
        %1983 = vmatprep.subr.mxu0 0.0
        %1984 = vmatpush2.msra.mxu0 0.0
        %1985 = vmatprep.subr.mxu0 0.0
        %1986 = vmatpush2.msra.mxu0 0.0
        %1987 = vmatprep.subr.mxu0 0.0
        %1988 = vmatpush2.msra.mxu0 0.0
        %1989 = vmatprep.subr.mxu0 0.0
        %1990 = vmatpush2.msra.mxu0 0.0
        %1991 = vmatprep.subr.mxu0 0.0
        %1992 = vmatpush2.msra.mxu0 0.0
        %1993 = vmatprep.subr.mxu0 0.0
        %1994 = vmatpush2.msra.mxu0 0.0
        %1995 = vmatprep.subr.mxu0 0.0
        %1996 = vmatpush2.msra.mxu0 0.0
        %1997 = vmatprep.subr.mxu0 0.0
        %1998 = vmatpush2.msra.mxu0 0.0
        %1999 = vmatprep.subr.mxu0 0.0
        %2000 = vmatpush2.msra.mxu0 0.0
        %2001 = vmatprep.subr.mxu0 0.0
        %2002 = vmatpush2.msra.mxu0 0.0
        %2003 = vmatprep.mubr.f32.mxu0 0.0
        %2004 = vmatmul.mubr.f32.gmra.mxu0 %v1859
        %v2005 = vpop.f32.mrf.mxu0
        %v2006 = vadd.f32 0.0, %v2005
        %v2007 = vpop.f32.mrf.mxu0
        %2008 = vdwg.mxu0
        %v2009 = vxor.u32 %v1928, 2147483648
        %v2010 = vmul.f32 %v2009, 1.442695
        %v2011 = vpow.pop %v2010
        %v2012 = vadd.f32 %v2011, 1.0
        %v2013 = vrcp.pop %v2012
        %v2014 = vmul.f32 1.0, %v2013
        %v2015 = vmul.f32 %v1928, %v2014
        %v2016 = vmul.f32 %v2015, %v2006
        %v2017 = vld [vmem:[%s15] sm:$0xff]
        %v2018 = vld [vmem:[%s15 + $0x8] sm:$0xff]
        %v2019 = vld [vmem:[%s15 + $0x10] sm:$0xff]
        %v2020 = vld [vmem:[%s15 + $0x18] sm:$0xff]
        %v2021 = vld [vmem:[%s15 + $0x20] sm:$0xff]
        %v2022 = vld [vmem:[%s15 + $0x28] sm:$0xff]
        %v2023 = vld [vmem:[%s15 + $0x30] sm:$0xff]
        %v2024 = vld [vmem:[%s15 + $0x38] sm:$0xff]
        %v2025 = vld [vmem:[%s15 + $0x40] sm:$0xff]
        %v2026 = vld [vmem:[%s15 + $0x48] sm:$0xff]
        %v2027 = vld [vmem:[%s15 + $0x50] sm:$0xff]
        %v2028 = vld [vmem:[%s15 + $0x58] sm:$0xff]
        %v2029 = vld [vmem:[%s15 + $0x60] sm:$0xff]
        %v2030 = vld [vmem:[%s15 + $0x68] sm:$0xff]
        %v2031 = vld [vmem:[%s15 + $0x70] sm:$0xff]
        %v2032 = vld [vmem:[%s15 + $0x78] sm:$0xff]
        %2033 = vmatprep.subr.mxu0 0.0
        %2034 = vmatpush1.msra.mxu0 %v2032
        %2035 = vmatprep.subr.mxu0 0.0
        %2036 = vmatpush1.msra.mxu0 %v2031
        %2037 = vmatprep.subr.mxu0 0.0
        %2038 = vmatpush1.msra.mxu0 %v2030
        %2039 = vmatprep.subr.mxu0 0.0
        %2040 = vmatpush1.msra.mxu0 %v2029
        %2041 = vmatprep.subr.mxu0 0.0
        %2042 = vmatpush1.msra.mxu0 %v2028
        %2043 = vmatprep.subr.mxu0 0.0
        %2044 = vmatpush1.msra.mxu0 %v2027
        %2045 = vmatprep.subr.mxu0 0.0
        %2046 = vmatpush1.msra.mxu0 %v2026
        %2047 = vmatprep.subr.mxu0 0.0
        %2048 = vmatpush1.msra.mxu0 %v2025
        %2049 = vmatprep.subr.mxu0 0.0
        %2050 = vmatpush1.msra.mxu0 %v2024
        %2051 = vmatprep.subr.mxu0 0.0
        %2052 = vmatpush1.msra.mxu0 %v2023
        %2053 = vmatprep.subr.mxu0 0.0
        %2054 = vmatpush1.msra.mxu0 %v2022
        %2055 = vmatprep.subr.mxu0 0.0
        %2056 = vmatpush1.msra.mxu0 %v2021
        %2057 = vmatprep.subr.mxu0 0.0
        %2058 = vmatpush1.msra.mxu0 %v2020
        %2059 = vmatprep.subr.mxu0 0.0
        %2060 = vmatpush1.msra.mxu0 %v2019
        %2061 = vmatprep.subr.mxu0 0.0
        %2062 = vmatpush1.msra.mxu0 %v2018
        %2063 = vmatprep.subr.mxu0 0.0
        %2064 = vmatpush1.msra.mxu0 %v2017
        %2065 = vmatprep.subr.mxu0 0.0
        %2066 = vmatpush2.msra.mxu0 0.0
        %2067 = vmatprep.subr.mxu0 0.0
        %2068 = vmatpush2.msra.mxu0 0.0
        %2069 = vmatprep.subr.mxu0 0.0
        %2070 = vmatpush2.msra.mxu0 0.0
        %2071 = vmatprep.subr.mxu0 0.0
        %2072 = vmatpush2.msra.mxu0 0.0
        %2073 = vmatprep.subr.mxu0 0.0
        %2074 = vmatpush2.msra.mxu0 0.0
        %2075 = vmatprep.subr.mxu0 0.0
        %2076 = vmatpush2.msra.mxu0 0.0
        %2077 = vmatprep.subr.mxu0 0.0
        %2078 = vmatpush2.msra.mxu0 0.0
        %2079 = vmatprep.subr.mxu0 0.0
        %2080 = vmatpush2.msra.mxu0 0.0
        %2081 = vmatprep.subr.mxu0 0.0
        %2082 = vmatpush2.msra.mxu0 0.0
        %2083 = vmatprep.subr.mxu0 0.0
        %2084 = vmatpush2.msra.mxu0 0.0
        %2085 = vmatprep.subr.mxu0 0.0
        %2086 = vmatpush2.msra.mxu0 0.0
        %2087 = vmatprep.subr.mxu0 0.0
        %2088 = vmatpush2.msra.mxu0 0.0
        %2089 = vmatprep.subr.mxu0 0.0
        %2090 = vmatpush2.msra.mxu0 0.0
        %2091 = vmatprep.subr.mxu0 0.0
        %2092 = vmatpush2.msra.mxu0 0.0
        %2093 = vmatprep.subr.mxu0 0.0
        %2094 = vmatpush2.msra.mxu0 0.0
        %2095 = vmatprep.subr.mxu0 0.0
        %2096 = vmatpush2.msra.mxu0 0.0
        %2097 = vmatprep.mubr.f32.mxu0 0.0
        %2098 = vmatmul.mubr.f32.gmra.mxu0 %v2016
        %v2099 = vpop.f32.mrf.mxu0
        %v2100 = vadd.f32 0.0, %v2099
        %v2101 = vpop.f32.mrf.mxu0
        %2102 = vdwg.mxu0
        %v2103 = vadd.f32 %v1833, %v2100
        %2104 = vst.msk [vmem:[%s551] sm:$0xff] %vm574, %v2103
        %s2105 = sand.u32 %s394, 1
        %s2106 = scalar_lea.sflag [#allocation3], %s2105
        %s2107 = sand.u32 %s394, 1
        %s2108 = smul.addr %s2107, 8
        %s2109 = scalar_lea.vmem [#allocation2], %s2108
        // Predicated region
        $region85: #{decoder_layer.1} parent=83 // pred_check
          %p2110 = pneg %p404
        $region86: #{decoder_layer.1} parent=83 // pred_check_branch
          %2112 = sbr.rel (%p2110) target = $region88
        $region87: #{decoder_layer.1} parent=83 // pred_region
          %s2114 = ssub.s32 128, 128
          %2115 = vsyncadd %s2106, %s2114
          %s2116 = smul.addr %s30, 128
          %s2117 = scalar_lea.hbm %s16, %s2116
          %s2119 = sshll.u32 %s2109, 4
          %s2120 = int_to_ptr.vmem [resolvable:$true] %s2119
          %2122 = dma.vmem_to_hbm [thread:$0]  %s2120, 128, %s2117, %s2106
        $region88: #{decoder_layer.1} parent=83 // pred_fallthru
          _
      $region84: #{decoder_layer.1} parent=5 // pred_fallthru
        _
      %p2123 = scmp.le.s32.totalorder 2, %s25
      // Predicated region
      $region89: #{decoder_layer.1} parent=5 // pred_check
        %p2124 = pneg %p2123
      $region90: #{decoder_layer.1} parent=5 // pred_check_branch
        %2126 = sbr.rel (%p2124) target = $region92
      $region91: #{decoder_layer.1} parent=5 // pred_region
        %s2127 = ssub.s32 %s25, 2
        // Predicated region
        $region93: #{decoder_layer.1} parent=91 // pred_check
          %p2128 = pneg %p410
        $region94: #{decoder_layer.1} parent=91 // pred_check_branch
          %2130 = sbr.rel (%p2128) target = $region96
        $region95: #{decoder_layer.1} parent=91 // pred_region
          %s2131 = sand.u32 %s395, 1
          %s2132 = scalar_lea.sflag [#allocation3], %s2131
          %s2133 = sand.u32 %s395, 1
          %s2134 = smul.addr %s2133, 8
          %s2135 = scalar_lea.vmem [#allocation2], %s2134
          %2136 = dma.done %s2132, 128
        $region96: #{decoder_layer.1} parent=91 // pred_fallthru
          _
      $region92: #{decoder_layer.1} parent=5 // pred_fallthru
        _
    $region6: #{decoder_layer.1} parent=1 // loop_footer
      %s29 = sadd.s32 1, %s25
    $region7: #{decoder_layer.1} parent=1 // loop_footer_branch
      %24 = sbr.rel target = $region3
    $region8: #{decoder_layer.1} parent=1 // loop_exit
      _
    %2137 = vsyncpa [#allocation3], 1
    %s2138 = scalar_lea.sflag [#allocation3], 1
    %2139 = vsyncpa %s2138, 1

</llo_original>
